<compile_context>
chip_gen: v7x
topology: tpu7x:2x2x1
jax: 0.10.0
libtpu: 0.0.40
codegen_flags: <defaults>
</compile_context>

<pallas_src>
import jax
import jax.numpy as jnp
from jax import lax
from jax.experimental import pallas as pl
from jax.experimental.pallas import tpu as pltpu


# --------------------------------------------------------------------------
# Kernels
# --------------------------------------------------------------------------
def _whiten_full_k_kernel(x_ref, mean_ref, w_ref, o_ref):
    # out[b, j] = sum_k (x[b, k] - mean[k]) * w[j, k]
    xc = x_ref[...] - mean_ref[...]                       # (Bp, F) - (1, F)
    o_ref[...] = lax.dot_general(
        xc, w_ref[...],
        dimension_numbers=(((1,), (1,)), ((), ())),       # contract K, no .T
        preferred_element_type=jnp.float32,
    ).astype(o_ref.dtype)


def _whiten_tiled_k_kernel(x_ref, mean_ref, w_ref, o_ref, acc_ref):
    # grid = (N_tiles, K_tiles); K is the last ("arbitrary") reduction axis.
    k = pl.program_id(1)

    @pl.when(k == 0)
    def _():
        acc_ref[...] = jnp.zeros_like(acc_ref)

    xc = x_ref[...] - mean_ref[...]                       # (Bp, tk) - (1, tk)
    acc_ref[...] += lax.dot_general(
        xc, w_ref[...],
        dimension_numbers=(((1,), (1,)), ((), ())),
        preferred_element_type=jnp.float32,
    )

    @pl.when(k == pl.num_programs(1) - 1)
    def _():
        o_ref[...] = acc_ref[...].astype(o_ref.dtype)


# --------------------------------------------------------------------------
# Tile selection: biggest contiguous w slabs within a portable VMEM budget.
# --------------------------------------------------------------------------
def _pick_tiles(F, dtype_bytes=4, w_budget_bytes=32 * 1024 * 1024):
    # 1) Full-K, multi-block: double-buffered (tn, F) slab must fit, and keep
    #    >= 2 j-blocks so v7x can split the N axis across its 2 TCs.
    max_tn_full = w_budget_bytes // (2 * F * dtype_bytes)
    for cand in (2048, 1024, 512, 256, 128):
        if cand <= max_tn_full and F % cand == 0 and F // cand >= 2:
            return cand, F
    # 2) Full-K, single block: whole w fits (small F).  grid = (1,).
    if 2 * F * F * dtype_bytes <= w_budget_bytes:
        return F, F
    # 3) Fallback: tile K as well; keep tk the larger dim (long contiguous
    #    runs inside each strided row DMA).
    for tk in (4096, 2048, 1024, 512, 256, 128):
        if F % tk == 0:
            for tn in (1024, 512, 256, 128):
                if F % tn == 0 and 2 * tn * tk * dtype_bytes <= w_budget_bytes:
                    return tn, tk
    return 128, 128


# --------------------------------------------------------------------------
# Wrapper
# --------------------------------------------------------------------------
def whiten_forward(x_nchw, mean, w, *, w_vmem_budget_bytes=32 * 1024 * 1024):
    """x_nchw: (B, C, H, W); mean: (F,); w: (F, F) with F = C*H*W."""
    B = x_nchw.shape[0]
    F = mean.shape[0]

    x = x_nchw.reshape(B, F).astype(jnp.float32)          # flatten(1)
    mean2d = mean.reshape(1, F).astype(jnp.float32)
    w = w.astype(jnp.float32)

    # Pad F to a multiple of 128 (lane) and B to a multiple of 8 (sublane).
    Fp = ((F + 127) // 128) * 128
    Bp = ((B + 7) // 8) * 8
    if Fp != F or Bp != B:
        x = jnp.pad(x, ((0, Bp - B), (0, Fp - F)))
        mean2d = jnp.pad(mean2d, ((0, 0), (0, Fp - F)))
        if Fp != F:
            w = jnp.pad(w, ((0, Fp - F), (0, Fp - F)))

    tn, tk = _pick_tiles(Fp, w_budget_bytes=w_vmem_budget_bytes)
    full_k = (tk == Fp)

    # Rough VMEM requirement (double-buffered blocks) + headroom; cap so the
    # request stays valid on v7x's 64 MiB physical VMEM.
    dt = 4
    w_buf = 2 * tn * tk * dt
    x_buf = 2 * Bp * (Fp if full_k else tk) * dt
    m_buf = 2 * (Fp if full_k else tk) * dt
    o_buf = 2 * Bp * tn * dt
    a_buf = 0 if full_k else Bp * tn * dt
    vmem_limit = min(
        max(int(1.25 * (w_buf + x_buf + m_buf + o_buf + a_buf)) + (2 << 20),
            16 << 20),
        48 << 20)

    cost = pl.CostEstimate(
        flops=2 * Bp * Fp * Fp,
        transcendentals=0,
        bytes_accessed=int(Fp * Fp * dt + 2 * Bp * Fp * dt + Fp * dt),
    )

    if full_k:
        out = pl.pallas_call(
            _whiten_full_k_kernel,
            out_shape=jax.ShapeDtypeStruct((Bp, Fp), x.dtype),
            grid_spec=pltpu.PrefetchScalarGridSpec(
                num_scalar_prefetch=0,
                grid=(Fp // tn,),
                in_specs=[
                    pl.BlockSpec((Bp, Fp), lambda j: (0, 0)),   # x, resident
                    pl.BlockSpec((1, Fp), lambda j: (0, 0)),    # mean, resident
                    pl.BlockSpec((tn, Fp), lambda j: (j, 0)),   # w row slab
                ],
                out_specs=pl.BlockSpec((Bp, tn), lambda j: (0, j)),
            ),
            compiler_params=pltpu.CompilerParams(
                dimension_semantics=("parallel",),
                vmem_limit_bytes=vmem_limit),
            cost_estimate=cost,
        )(x, mean2d, w)
    else:
        out = pl.pallas_call(
            _whiten_tiled_k_kernel,
            out_shape=jax.ShapeDtypeStruct((Bp, Fp), x.dtype),
            grid_spec=pltpu.PrefetchScalarGridSpec(
                num_scalar_prefetch=0,
                grid=(Fp // tn, Fp // tk),
                in_specs=[
                    pl.BlockSpec((Bp, tk), lambda j, k: (0, k)),
                    pl.BlockSpec((1, tk), lambda j, k: (0, k)),
                    pl.BlockSpec((tn, tk), lambda j, k: (j, k)),
                ],
                out_specs=pl.BlockSpec((Bp, tn), lambda j, k: (0, j)),
                scratch_shapes=[pltpu.VMEM((Bp, tn), jnp.float32)],
            ),
            compiler_params=pltpu.CompilerParams(
                dimension_semantics=("parallel", "arbitrary"),
                vmem_limit_bytes=vmem_limit),
            cost_estimate=cost,
        )(x, mean2d, w)

    if Bp != B or Fp != F:
        out = out[:B, :F]
    return out


# TODO(synk): only forward() is a kernel; fit()/mean_cov() (eigh, running
# covariance updates) are host-side setup and are left to plain JAX/LAPACK.

if __name__ == "__main__":
    # Small shapes consistent with the module: NCHW input, F = C*H*W.
    B, C, H, W = 2, 4, 16, 16
    F = C * H * W  # 1024

    key = jax.random.PRNGKey(0)
    kx, km, kw = jax.random.split(key, 3)

    x = jax.random.normal(kx, (B, C, H, W), dtype=jnp.float32)
    # Deterministic parameter values (module __init__ gives shapes (F,) and (F,F)).
    mean = jax.random.normal(km, (F,), dtype=jnp.float32) * 0.1
    w = jax.random.normal(kw, (F, F), dtype=jnp.float32) * (1.0 / jnp.sqrt(F))

    out = whiten_forward(x, mean, w)
    out = jax.block_until_ready(out)

    # Pure-JAX reference of the PyTorch forward.
    ref = (x.reshape(B, F) - mean) @ w.T
    assert out.shape == (B, F)
    assert jnp.allclose(out, ref, atol=1e-3, rtol=1e-3), "mismatch vs reference"

    print("KERNEL_OK")
</pallas_src>

<mosaic_0001>
module attributes {stable_mosaic.version = 11 : i64} {
  func.func @_whiten_full_k_kernel(%arg0: i32, %arg1: memref<8x1024xf32, #tpu.memory_space<vmem>>, %arg2: memref<1x1024xf32, #tpu.memory_space<vmem>>, %arg3: memref<512x1024xf32, #tpu.memory_space<vmem>>, %arg4: memref<8x512xf32, #tpu.memory_space<vmem>>) attributes {dimension_semantics = [#tpu.dimension_semantics<parallel>], iteration_bounds = array<i64: 2>, scalar_prefetch = 0 : i64, scratch_operands = 0 : i64, tpu.core_type = #tpu.core_type<tc>, window_params = [{pipeline_mode = #tpu.pipeline_mode<synchronous>, transform_indices = @transform_0, window_bounds = array<i64: 8, 1024>}, {pipeline_mode = #tpu.pipeline_mode<synchronous>, transform_indices = @transform_1, window_bounds = array<i64: 1, 1024>}, {transform_indices = @transform_2, window_bounds = array<i64: 512, 1024>}, {transform_indices = @transform_3, window_bounds = array<i64: 8, 512>}]} {
    %c0 = arith.constant 0 : index
    %c0_0 = arith.constant 0 : index
    %0 = vector.load %arg1[%c0, %c0_0] : memref<8x1024xf32, #tpu.memory_space<vmem>>, vector<8x1024xf32>
    %c0_1 = arith.constant 0 : index
    %c0_2 = arith.constant 0 : index
    %1 = vector.load %arg2[%c0_1, %c0_2] : memref<1x1024xf32, #tpu.memory_space<vmem>>, vector<1x1024xf32>
    %2 = vector.broadcast %1 : vector<1x1024xf32> to vector<8x1024xf32>
    %3 = arith.subf %0, %2 : vector<8x1024xf32>
    %c0_3 = arith.constant 0 : index
    %c0_4 = arith.constant 0 : index
    %4 = vector.load %arg3[%c0_3, %c0_4] : memref<512x1024xf32, #tpu.memory_space<vmem>>, vector<512x1024xf32>
    %cst = arith.constant dense<0.000000e+00> : vector<8x512xf32>
    %5 = tpu.matmul %3, %4, %cst {dimension_numbers = #tpu.dot_dimension_numbers<[1], [1], [0], [0], [0, 0, 1, 0], [], []>} : vector<8x1024xf32>, vector<512x1024xf32>, vector<8x512xf32> -> vector<8x512xf32>
    %c0_5 = arith.constant 0 : index
    %c0_6 = arith.constant 0 : index
    %6 = vector.load %arg4[%c0_5, %c0_6] : memref<8x512xf32, #tpu.memory_space<vmem>>, vector<8x512xf32>
    tpu.vector_store %arg4[%c0_5, %c0_6], %5 {strides = array<i32>} : memref<8x512xf32, #tpu.memory_space<vmem>>, vector<8x512xf32>,
    return
  }
  func.func @transform_0(%arg0: i32) -> (i32, i32) {
    %c0_i32 = arith.constant 0 : i32
    %c0_i32_0 = arith.constant 0 : i32
    %c0_i32_1 = arith.constant 0 : i32
    return %c0_i32, %c0_i32_0 : i32, i32
  }
  func.func @transform_1(%arg0: i32) -> (i32, i32) {
    %c0_i32 = arith.constant 0 : i32
    %c0_i32_0 = arith.constant 0 : i32
    %c0_i32_1 = arith.constant 0 : i32
    return %c0_i32, %c0_i32_0 : i32, i32
  }
  func.func @transform_2(%arg0: i32) -> (i32, i32) {
    %c0_i32 = arith.constant 0 : i32
    %c0_i32_0 = arith.constant 0 : i32
    return %arg0, %c0_i32 : i32, i32
  }
  func.func @transform_3(%arg0: i32) -> (i32, i32) {
    %c0_i32 = arith.constant 0 : i32
    %c0_i32_0 = arith.constant 0 : i32
    return %c0_i32, %arg0 : i32, i32
  }
}

</mosaic_0001>

<llo_original>
// kernel: tpu_custom_call.1
$region0: #{tpu_custom_call.1}
  #allocation0 [shape = 'u32[]', space=smem, size = 0x4, offset = 0x4, fixed_abs, tag = 'smem constant byte address 0x4 - core index']
  #allocation1 [shape = 'u32[144,128]{1,0:T(1,128)}', space=vmem, size = 0x12000, scoped, tag = 'internal scratch']
  %s0 = inlined_call_operand.hbm [shape: f32[8,1024], index: 0, kind: input, shape index: {}]
  %s1 = inlined_call_operand.hbm [shape: f32[1,1024], index: 1, kind: input, shape index: {}]
  %s2 = inlined_call_operand.hbm [shape: f32[1024,1024], index: 2, kind: input, shape index: {}]
  %s3 = inlined_call_operand.hbm [shape: f32[8,1024], index: 3, kind: output, shape index: {}]
  %s4 = sld [smem:[#allocation0]]
  $region57: #{tpu_custom_call.1} parent=0
    _
  %s6 = ssub.s32 1, %s4
  %s7 = scalar_select 0, %s6, %s4
  $region1: #{tpu_custom_call.1} parent=0
    #allocation2 [shape = 'u8[32768]{0}', space=vmem, size = 0x8000, scoped, tag = 'input window, operand 0, single buffered']
    #allocation3 [shape = 's32[2]{0}', space=sflag, size = 0x8, scoped, tag = 'scoped memory for tpu_custom_call.1']
    #allocation4 [shape = 's32[2]{0}', space=sflag, size = 0x8, scoped, tag = 'scoped memory for tpu_custom_call.1']
    #allocation5 [shape = 'u8[4096]{0}', space=vmem, size = 0x1000, scoped, tag = 'input window, operand 1, single buffered']
    #allocation6 [shape = 's32[1]{0}', space=sflag, size = 0x4, scoped, tag = 'scoped memory for tpu_custom_call.1']
    #allocation7 [shape = 'u8[4194304]{0}', space=vmem, size = 0x400000, scoped, tag = 'input window, operand 2']
    #allocation8 [shape = 'u8[32768]{0}', space=vmem, size = 0x8000, scoped, tag = 'output window, operand 0']
    %8 = vsyncpa [#allocation3], 0
    %9 = vsyncpa [#allocation6], 0
    %10 = vsyncpa [#allocation4], 0
    %s11 = scalar_lea.sflag [#allocation4], 1
    %12 = vsyncpa %s11, 0
    loop: start=0, step=1, limit=4
    $region2: #{tpu_custom_call.1} parent=1 // loop_pre_header
      _
    $region3: #{tpu_custom_call.1} parent=1 // loop_header
      %s14 = sphi 0, %s18
      %p15 = scmp.ge.s32.totalorder %s14, 4
      %s22 = sphi 0, %s22
      %s24 = sphi 0, %s22
      %s25 = sphi 0, %s24
      %s39 = sphi 0, %s25
      %s43 = sphi 0, %s43
      %s45 = sphi 0, %s43
      %s46 = sphi 0, %s45
      %s60 = sphi 0, %s46
      %s66 = sphi 0, %s68
      %s69 = sphi 0, %s66
      %s70 = sphi 0, %s69
      %s86 = sphi 0, %s70
      %s92 = sphi 0, %s94
      %s95 = sphi 0, %s92
      %s96 = sphi 0, %s95
      %s112 = sphi 0, %s96
    $region4: #{tpu_custom_call.1} parent=1 // loop_header_branch
      %17 = sbr.rel (%p15) target = $region8
    $region5: #{tpu_custom_call.1} parent=1 // loop_body
      %s19 = ssub.s32 %s14, 1
      %s20 = ssub.s32 %s14, 2
      %s21 = sadd.s32 %s14, 1
      %s23 = sadd.s32 %s22, 1
      %p26 = scmp.eq.s32.totalorder %s14, 1
      %p27 = scmp.ne.s32.totalorder %s22, %s24
      %p28 = scmp.eq.s32.totalorder %s14, 0
      %p29 = por %p27, %p28
      %p30 = scmp.ne.s32.totalorder %s22, %s24
      %p31 = scmp.eq.s32.totalorder %s19, 1
      %p32 = por %p30, %p31
      %p33 = scmp.ne.s32.totalorder %s24, %s25
      %p34 = scmp.eq.s32.totalorder %s19, 0
      %p35 = por %p33, %p34
      %p36 = scmp.ne.s32.totalorder %s24, %s25
      %p37 = scmp.eq.s32.totalorder %s20, 1
      %p38 = por %p36, %p37
      %p40 = scmp.ne.s32.totalorder %s25, %s39
      %p41 = scmp.eq.s32.totalorder %s20, 0
      %p42 = por %p40, %p41
      %s44 = sadd.s32 %s43, 1
      %p47 = scmp.eq.s32.totalorder %s14, 1
      %p48 = scmp.ne.s32.totalorder %s43, %s45
      %p49 = scmp.eq.s32.totalorder %s14, 0
      %p50 = por %p48, %p49
      %p51 = scmp.ne.s32.totalorder %s43, %s45
      %p52 = scmp.eq.s32.totalorder %s19, 1
      %p53 = por %p51, %p52
      %p54 = scmp.ne.s32.totalorder %s45, %s46
      %p55 = scmp.eq.s32.totalorder %s19, 0
      %p56 = por %p54, %p55
      %p57 = scmp.ne.s32.totalorder %s45, %s46
      %p58 = scmp.eq.s32.totalorder %s20, 1
      %p59 = por %p57, %p58
      %p61 = scmp.ne.s32.totalorder %s46, %s60
      %p62 = scmp.eq.s32.totalorder %s20, 0
      %p63 = por %p61, %p62
      %s64 = ssub.s32 %s14, %s21
      %p65 = scmp.eq.s32.totalorder %s64, 0
      %s67 = sadd.s32 %s66, 1
      %s68 = scalar_select %p65, %s66, %s67
      %p71 = pneg %p65
      %p72 = scmp.eq.s32.totalorder %s14, 1
      %p73 = por %p71, %p72
      %p74 = scmp.ne.s32.totalorder %s66, %s69
      %p75 = scmp.eq.s32.totalorder %s14, 0
      %p76 = por %p74, %p75
      %p77 = scmp.ne.s32.totalorder %s66, %s69
      %p78 = scmp.eq.s32.totalorder %s19, 1
      %p79 = por %p77, %p78
      %p80 = scmp.ne.s32.totalorder %s69, %s70
      %p81 = scmp.eq.s32.totalorder %s19, 0
      %p82 = por %p80, %p81
      %p83 = scmp.ne.s32.totalorder %s69, %s70
      %p84 = scmp.eq.s32.totalorder %s20, 1
      %p85 = por %p83, %p84
      %p87 = scmp.ne.s32.totalorder %s70, %s86
      %p88 = scmp.eq.s32.totalorder %s20, 0
      %p89 = por %p87, %p88
      %s90 = ssub.s32 %s14, %s21
      %p91 = scmp.eq.s32.totalorder %s90, 0
      %s93 = sadd.s32 %s92, 1
      %s94 = scalar_select %p91, %s92, %s93
      %p97 = pneg %p91
      %p98 = scmp.eq.s32.totalorder %s14, 1
      %p99 = por %p97, %p98
      %p100 = scmp.ne.s32.totalorder %s92, %s95
      %p101 = scmp.eq.s32.totalorder %s14, 0
      %p102 = por %p100, %p101
      %p103 = scmp.ne.s32.totalorder %s92, %s95
      %p104 = scmp.eq.s32.totalorder %s19, 1
      %p105 = por %p103, %p104
      %p106 = scmp.ne.s32.totalorder %s95, %s96
      %p107 = scmp.eq.s32.totalorder %s19, 0
      %p108 = por %p106, %p107
      %p109 = scmp.ne.s32.totalorder %s95, %s96
      %p110 = scmp.eq.s32.totalorder %s20, 1
      %p111 = por %p109, %p110
      %p113 = scmp.ne.s32.totalorder %s96, %s112
      %p114 = scmp.eq.s32.totalorder %s20, 0
      %p115 = por %p113, %p114
      %p116 = scmp.le.s32.totalorder 1, %s14
      %p117 = scmp.lt.s32.totalorder %s14, 3
      %p118 = pnand %p116, %p117
      %p119 = pneg %p118
      // Predicated region
      $region9: #{tpu_custom_call.1} parent=5 // pred_check
        _
      $region10: #{tpu_custom_call.1} parent=5 // pred_check_branch
        %121 = sbr.rel (%p118) target = $region12
      $region11: #{tpu_custom_call.1} parent=5 // pred_region
        %s122 = ssub.s32 %s14, 1
        // Predicated region
        $region13: #{tpu_custom_call.1} parent=11 // pred_check
          %p123 = pneg %p35
        $region14: #{tpu_custom_call.1} parent=11 // pred_check_branch
          %125 = sbr.rel (%p123) target = $region16
        $region15: #{tpu_custom_call.1} parent=11 // pred_region
          %s127 = ssub.s32 1024, 1024
          %128 = vsyncadd [#allocation3], %s127
          %s130 = sshll.u32 [#allocation2], 4
          %s131 = int_to_ptr.vmem [resolvable:$true] %s130
          %133 = dma.hbm_to_vmem [thread:$0]  %s0, 1024, %s131, [#allocation3]
        $region16: #{tpu_custom_call.1} parent=11 // pred_fallthru
          _
        // Predicated region
        $region17: #{tpu_custom_call.1} parent=11 // pred_check
          %p134 = pneg %p56
        $region18: #{tpu_custom_call.1} parent=11 // pred_check_branch
          %136 = sbr.rel (%p134) target = $region20
        $region19: #{tpu_custom_call.1} parent=11 // pred_region
          %s138 = ssub.s32 128, 128
          %139 = vsyncadd [#allocation6], %s138
          %s141 = sshll.u32 [#allocation5], 4
          %s142 = int_to_ptr.vmem [resolvable:$true] %s141
          %144 = dma.hbm_to_vmem [thread:$0]  %s1, 128, %s142, [#allocation6]
        $region20: #{tpu_custom_call.1} parent=11 // pred_fallthru
          _
      $region12: #{tpu_custom_call.1} parent=5 // pred_fallthru
        _
      %p145 = scmp.lt.s32.totalorder %s14, 2
      // Predicated region
      $region21: #{tpu_custom_call.1} parent=5 // pred_check
        %p146 = pneg %p145
      $region22: #{tpu_custom_call.1} parent=5 // pred_check_branch
        %148 = sbr.rel (%p146) target = $region24
      $region23: #{tpu_custom_call.1} parent=5 // pred_region
        // Predicated region
        $region25: #{tpu_custom_call.1} parent=23 // pred_check
          %p149 = pneg %p76
        $region26: #{tpu_custom_call.1} parent=23 // pred_check_branch
          %151 = sbr.rel (%p149) target = $region28
        $region27: #{tpu_custom_call.1} parent=23 // pred_region
          %s152 = sand.u32 %s14, 1
          %s153 = scalar_lea.sflag [#allocation3], %s152
          %s154 = sand.u32 %s66, 1
          %s155 = smul.addr %s154, 4096
          %s156 = scalar_lea.vmem [#allocation7], %s155
          %s157 = smul.u32 64, %s14
          %s159 = ssub.s32 65536, 65536
          %160 = vsyncadd %s153, %s159
          %s161 = smul.addr %s157, 8
          %s162 = smul.addr %s161, 128
          %s163 = scalar_lea.hbm %s2, %s162
          %s164 = sshll.u32 %s156, 4
          %s165 = int_to_ptr.vmem [resolvable:$true] %s164
          %170 = dma.hbm_to_vmem [thread:$0]  %s163, 65536, %s165, %s153, 1024, 1024, 64
        $region28: #{tpu_custom_call.1} parent=23 // pred_fallthru
          _
      $region24: #{tpu_custom_call.1} parent=5 // pred_fallthru
        _
      %p171 = scmp.le.s32.totalorder 1, %s14
      %p172 = scmp.lt.s32.totalorder %s14, 3
      %p173 = pnand %p171, %p172
      %p174 = pneg %p173
      // Predicated region
      $region29: #{tpu_custom_call.1} parent=5 // pred_check
        _
      $region30: #{tpu_custom_call.1} parent=5 // pred_check_branch
        %176 = sbr.rel (%p173) target = $region32
      $region31: #{tpu_custom_call.1} parent=5 // pred_region
        %s177 = ssub.s32 %s14, 1
        // Predicated region
        $region33: #{tpu_custom_call.1} parent=31 // pred_check
          %p178 = pneg %p35
        $region34: #{tpu_custom_call.1} parent=31 // pred_check_branch
          %180 = sbr.rel (%p178) target = $region36
        $region35: #{tpu_custom_call.1} parent=31 // pred_region
          %181 = dma.done [#allocation3], 1024
        $region36: #{tpu_custom_call.1} parent=31 // pred_fallthru
          _
        // Predicated region
        $region37: #{tpu_custom_call.1} parent=31 // pred_check
          %p182 = pneg %p56
        $region38: #{tpu_custom_call.1} parent=31 // pred_check_branch
          %184 = sbr.rel (%p182) target = $region40
        $region39: #{tpu_custom_call.1} parent=31 // pred_region
          %185 = dma.done [#allocation6], 128
        $region40: #{tpu_custom_call.1} parent=31 // pred_fallthru
          _
        %s186 = sand.u32 %s19, 1
        %s187 = scalar_lea.sflag [#allocation3], %s186
        %s188 = sand.u32 %s69, 1
        %s189 = smul.addr %s188, 4096
        %s190 = scalar_lea.vmem [#allocation7], %s189
        // Predicated region
        $region41: #{tpu_custom_call.1} parent=31 // pred_check
          %p191 = pneg %p82
        $region42: #{tpu_custom_call.1} parent=31 // pred_check_branch
          %193 = sbr.rel (%p191) target = $region44
        $region43: #{tpu_custom_call.1} parent=31 // pred_region
          %194 = dma.done %s187, 65536
        $region44: #{tpu_custom_call.1} parent=31 // pred_fallthru
          _
        %p195 = pneg %p35
        %p196 = pneg %p32
        %p197 = pneg %p56
        %p198 = pneg %p53
        %s199 = sand.u32 %s19, 1
        %s200 = scalar_lea.sflag [#allocation3], %s199
        %s201 = sand.u32 %s69, 1
        %s202 = smul.addr %s201, 4096
        %s203 = scalar_lea.vmem [#allocation7], %s202
        %p204 = pneg %p82
        %p205 = pneg %p79
        %p206 = pneg %p108
        %p207 = pneg %p105
        %s208 = sand.u32 %s95, 1
        %s209 = scalar_lea.sflag [#allocation4], %s208
        %s210 = sand.u32 %s95, 1
        %s211 = smul.addr %s210, 32
        %s212 = scalar_lea.vmem [#allocation8], %s211
        %s213 = smul.u32 64, %s19
        %s214 = smul.u32 4, %s19
        %v215 = vld [vmem:[#allocation2] sm:$0xff]
        %v216 = vld [vmem:[#allocation2 + $0x8] sm:$0xff]
        %v217 = vld [vmem:[#allocation2 + $0x10] sm:$0xff]
        %v218 = vld [vmem:[#allocation2 + $0x18] sm:$0xff]
        %v219 = vld [vmem:[#allocation2 + $0x20] sm:$0xff]
        %v220 = vld [vmem:[#allocation2 + $0x28] sm:$0xff]
        %v221 = vld [vmem:[#allocation2 + $0x30] sm:$0xff]
        %v222 = vld [vmem:[#allocation2 + $0x38] sm:$0xff]
        %v223 = vld [vmem:[#allocation5] sm:$0xff]
        %v225 = vlaneseq
        %v226 = vshrl.u32 %v225, 7
        %v227 = vsub.s32 0, %v226
        %v228 = vrot.slane %v223, %v227
        %v229 = vlaneseq
        %v230 = vshrl.u32 %v229, 7
        %v231 = vsub.s32 1, %v230
        %v232 = vrot.slane %v223, %v231
        %v233 = vlaneseq
        %v234 = vshrl.u32 %v233, 7
        %v235 = vsub.s32 2, %v234
        %v236 = vrot.slane %v223, %v235
        %v237 = vlaneseq
        %v238 = vshrl.u32 %v237, 7
        %v239 = vsub.s32 3, %v238
        %v240 = vrot.slane %v223, %v239
        %v241 = vlaneseq
        %v242 = vshrl.u32 %v241, 7
        %v243 = vsub.s32 4, %v242
        %v244 = vrot.slane %v223, %v243
        %v245 = vlaneseq
        %v246 = vshrl.u32 %v245, 7
        %v247 = vsub.s32 5, %v246
        %v248 = vrot.slane %v223, %v247
        %v249 = vlaneseq
        %v250 = vshrl.u32 %v249, 7
        %v251 = vsub.s32 6, %v250
        %v252 = vrot.slane %v223, %v251
        %v253 = vlaneseq
        %v254 = vshrl.u32 %v253, 7
        %v255 = vsub.s32 7, %v254
        %v256 = vrot.slane %v223, %v255
        %v265 = vsub.f32 %v215, %v228
        %v266 = vsub.f32 %v216, %v232
        %v267 = vsub.f32 %v217, %v236
        %v268 = vsub.f32 %v218, %v240
        %v269 = vsub.f32 %v219, %v244
        %v270 = vsub.f32 %v220, %v248
        %v271 = vsub.f32 %v221, %v252
        %v272 = vsub.f32 %v222, %v256
        %v273 = vld [vmem:[%s190] sm:$0xff]
        %v274 = vld [vmem:[%s190 + $0x8] sm:$0xff]
        %v275 = vld [vmem:[%s190 + $0x10] sm:$0xff]
        %v276 = vld [vmem:[%s190 + $0x18] sm:$0xff]
        %v277 = vld [vmem:[%s190 + $0x20] sm:$0xff]
        %v278 = vld [vmem:[%s190 + $0x28] sm:$0xff]
        %v279 = vld [vmem:[%s190 + $0x30] sm:$0xff]
        %v280 = vld [vmem:[%s190 + $0x38] sm:$0xff]
        %v281 = vld [vmem:[%s190 + $0x40] sm:$0xff]
        %v282 = vld [vmem:[%s190 + $0x48] sm:$0xff]
        %v283 = vld [vmem:[%s190 + $0x50] sm:$0xff]
        %v284 = vld [vmem:[%s190 + $0x58] sm:$0xff]
        %v285 = vld [vmem:[%s190 + $0x60] sm:$0xff]
        %v286 = vld [vmem:[%s190 + $0x68] sm:$0xff]
        %v287 = vld [vmem:[%s190 + $0x70] sm:$0xff]
        %v288 = vld [vmem:[%s190 + $0x78] sm:$0xff]
        %v289 = vld [vmem:[%s190 + $0x80] sm:$0xff]
        %v290 = vld [vmem:[%s190 + $0x88] sm:$0xff]
        %v291 = vld [vmem:[%s190 + $0x90] sm:$0xff]
        %v292 = vld [vmem:[%s190 + $0x98] sm:$0xff]
        %v293 = vld [vmem:[%s190 + $0xa0] sm:$0xff]
        %v294 = vld [vmem:[%s190 + $0xa8] sm:$0xff]
        %v295 = vld [vmem:[%s190 + $0xb0] sm:$0xff]
        %v296 = vld [vmem:[%s190 + $0xb8] sm:$0xff]
        %v297 = vld [vmem:[%s190 + $0xc0] sm:$0xff]
        %v298 = vld [vmem:[%s190 + $0xc8] sm:$0xff]
        %v299 = vld [vmem:[%s190 + $0xd0] sm:$0xff]
        %v300 = vld [vmem:[%s190 + $0xd8] sm:$0xff]
        %v301 = vld [vmem:[%s190 + $0xe0] sm:$0xff]
        %v302 = vld [vmem:[%s190 + $0xe8] sm:$0xff]
        %v303 = vld [vmem:[%s190 + $0xf0] sm:$0xff]
        %v304 = vld [vmem:[%s190 + $0xf8] sm:$0xff]
        %v305 = vld [vmem:[%s190 + $0x100] sm:$0xff]
        %v306 = vld [vmem:[%s190 + $0x108] sm:$0xff]
        %v307 = vld [vmem:[%s190 + $0x110] sm:$0xff]
        %v308 = vld [vmem:[%s190 + $0x118] sm:$0xff]
        %v309 = vld [vmem:[%s190 + $0x120] sm:$0xff]
        %v310 = vld [vmem:[%s190 + $0x128] sm:$0xff]
        %v311 = vld [vmem:[%s190 + $0x130] sm:$0xff]
        %v312 = vld [vmem:[%s190 + $0x138] sm:$0xff]
        %v313 = vld [vmem:[%s190 + $0x140] sm:$0xff]
        %v314 = vld [vmem:[%s190 + $0x148] sm:$0xff]
        %v315 = vld [vmem:[%s190 + $0x150] sm:$0xff]
        %v316 = vld [vmem:[%s190 + $0x158] sm:$0xff]
        %v317 = vld [vmem:[%s190 + $0x160] sm:$0xff]
        %v318 = vld [vmem:[%s190 + $0x168] sm:$0xff]
        %v319 = vld [vmem:[%s190 + $0x170] sm:$0xff]
        %v320 = vld [vmem:[%s190 + $0x178] sm:$0xff]
        %v321 = vld [vmem:[%s190 + $0x180] sm:$0xff]
        %v322 = vld [vmem:[%s190 + $0x188] sm:$0xff]
        %v323 = vld [vmem:[%s190 + $0x190] sm:$0xff]
        %v324 = vld [vmem:[%s190 + $0x198] sm:$0xff]
        %v325 = vld [vmem:[%s190 + $0x1a0] sm:$0xff]
        %v326 = vld [vmem:[%s190 + $0x1a8] sm:$0xff]
        %v327 = vld [vmem:[%s190 + $0x1b0] sm:$0xff]
        %v328 = vld [vmem:[%s190 + $0x1b8] sm:$0xff]
        %v329 = vld [vmem:[%s190 + $0x1c0] sm:$0xff]
        %v330 = vld [vmem:[%s190 + $0x1c8] sm:$0xff]
        %v331 = vld [vmem:[%s190 + $0x1d0] sm:$0xff]
        %v332 = vld [vmem:[%s190 + $0x1d8] sm:$0xff]
        %v333 = vld [vmem:[%s190 + $0x1e0] sm:$0xff]
        %v334 = vld [vmem:[%s190 + $0x1e8] sm:$0xff]
        %v335 = vld [vmem:[%s190 + $0x1f0] sm:$0xff]
        %v336 = vld [vmem:[%s190 + $0x1f8] sm:$0xff]
        %v337 = vld [vmem:[%s190 + $0x200] sm:$0xff]
        %v338 = vld [vmem:[%s190 + $0x208] sm:$0xff]
        %v339 = vld [vmem:[%s190 + $0x210] sm:$0xff]
        %v340 = vld [vmem:[%s190 + $0x218] sm:$0xff]
        %v341 = vld [vmem:[%s190 + $0x220] sm:$0xff]
        %v342 = vld [vmem:[%s190 + $0x228] sm:$0xff]
        %v343 = vld [vmem:[%s190 + $0x230] sm:$0xff]
        %v344 = vld [vmem:[%s190 + $0x238] sm:$0xff]
        %v345 = vld [vmem:[%s190 + $0x240] sm:$0xff]
        %v346 = vld [vmem:[%s190 + $0x248] sm:$0xff]
        %v347 = vld [vmem:[%s190 + $0x250] sm:$0xff]
        %v348 = vld [vmem:[%s190 + $0x258] sm:$0xff]
        %v349 = vld [vmem:[%s190 + $0x260] sm:$0xff]
        %v350 = vld [vmem:[%s190 + $0x268] sm:$0xff]
        %v351 = vld [vmem:[%s190 + $0x270] sm:$0xff]
        %v352 = vld [vmem:[%s190 + $0x278] sm:$0xff]
        %v353 = vld [vmem:[%s190 + $0x280] sm:$0xff]
        %v354 = vld [vmem:[%s190 + $0x288] sm:$0xff]
        %v355 = vld [vmem:[%s190 + $0x290] sm:$0xff]
        %v356 = vld [vmem:[%s190 + $0x298] sm:$0xff]
        %v357 = vld [vmem:[%s190 + $0x2a0] sm:$0xff]
        %v358 = vld [vmem:[%s190 + $0x2a8] sm:$0xff]
        %v359 = vld [vmem:[%s190 + $0x2b0] sm:$0xff]
        %v360 = vld [vmem:[%s190 + $0x2b8] sm:$0xff]
        %v361 = vld [vmem:[%s190 + $0x2c0] sm:$0xff]
        %v362 = vld [vmem:[%s190 + $0x2c8] sm:$0xff]
        %v363 = vld [vmem:[%s190 + $0x2d0] sm:$0xff]
        %v364 = vld [vmem:[%s190 + $0x2d8] sm:$0xff]
        %v365 = vld [vmem:[%s190 + $0x2e0] sm:$0xff]
        %v366 = vld [vmem:[%s190 + $0x2e8] sm:$0xff]
        %v367 = vld [vmem:[%s190 + $0x2f0] sm:$0xff]
        %v368 = vld [vmem:[%s190 + $0x2f8] sm:$0xff]
        %v369 = vld [vmem:[%s190 + $0x300] sm:$0xff]
        %v370 = vld [vmem:[%s190 + $0x308] sm:$0xff]
        %v371 = vld [vmem:[%s190 + $0x310] sm:$0xff]
        %v372 = vld [vmem:[%s190 + $0x318] sm:$0xff]
        %v373 = vld [vmem:[%s190 + $0x320] sm:$0xff]
        %v374 = vld [vmem:[%s190 + $0x328] sm:$0xff]
        %v375 = vld [vmem:[%s190 + $0x330] sm:$0xff]
        %v376 = vld [vmem:[%s190 + $0x338] sm:$0xff]
        %v377 = vld [vmem:[%s190 + $0x340] sm:$0xff]
        %v378 = vld [vmem:[%s190 + $0x348] sm:$0xff]
        %v379 = vld [vmem:[%s190 + $0x350] sm:$0xff]
        %v380 = vld [vmem:[%s190 + $0x358] sm:$0xff]
        %v381 = vld [vmem:[%s190 + $0x360] sm:$0xff]
        %v382 = vld [vmem:[%s190 + $0x368] sm:$0xff]
        %v383 = vld [vmem:[%s190 + $0x370] sm:$0xff]
        %v384 = vld [vmem:[%s190 + $0x378] sm:$0xff]
        %v385 = vld [vmem:[%s190 + $0x380] sm:$0xff]
        %v386 = vld [vmem:[%s190 + $0x388] sm:$0xff]
        %v387 = vld [vmem:[%s190 + $0x390] sm:$0xff]
        %v388 = vld [vmem:[%s190 + $0x398] sm:$0xff]
        %v389 = vld [vmem:[%s190 + $0x3a0] sm:$0xff]
        %v390 = vld [vmem:[%s190 + $0x3a8] sm:$0xff]
        %v391 = vld [vmem:[%s190 + $0x3b0] sm:$0xff]
        %v392 = vld [vmem:[%s190 + $0x3b8] sm:$0xff]
        %v393 = vld [vmem:[%s190 + $0x3c0] sm:$0xff]
        %v394 = vld [vmem:[%s190 + $0x3c8] sm:$0xff]
        %v395 = vld [vmem:[%s190 + $0x3d0] sm:$0xff]
        %v396 = vld [vmem:[%s190 + $0x3d8] sm:$0xff]
        %v397 = vld [vmem:[%s190 + $0x3e0] sm:$0xff]
        %v398 = vld [vmem:[%s190 + $0x3e8] sm:$0xff]
        %v399 = vld [vmem:[%s190 + $0x3f0] sm:$0xff]
        %v400 = vld [vmem:[%s190 + $0x3f8] sm:$0xff]
        %v401 = vld [vmem:[%s190 + $0x400] sm:$0xff]
        %v402 = vld [vmem:[%s190 + $0x408] sm:$0xff]
        %v403 = vld [vmem:[%s190 + $0x410] sm:$0xff]
        %v404 = vld [vmem:[%s190 + $0x418] sm:$0xff]
        %v405 = vld [vmem:[%s190 + $0x420] sm:$0xff]
        %v406 = vld [vmem:[%s190 + $0x428] sm:$0xff]
        %v407 = vld [vmem:[%s190 + $0x430] sm:$0xff]
        %v408 = vld [vmem:[%s190 + $0x438] sm:$0xff]
        %v409 = vld [vmem:[%s190 + $0x440] sm:$0xff]
        %v410 = vld [vmem:[%s190 + $0x448] sm:$0xff]
        %v411 = vld [vmem:[%s190 + $0x450] sm:$0xff]
        %v412 = vld [vmem:[%s190 + $0x458] sm:$0xff]
        %v413 = vld [vmem:[%s190 + $0x460] sm:$0xff]
        %v414 = vld [vmem:[%s190 + $0x468] sm:$0xff]
        %v415 = vld [vmem:[%s190 + $0x470] sm:$0xff]
        %v416 = vld [vmem:[%s190 + $0x478] sm:$0xff]
        %v417 = vld [vmem:[%s190 + $0x480] sm:$0xff]
        %v418 = vld [vmem:[%s190 + $0x488] sm:$0xff]
        %v419 = vld [vmem:[%s190 + $0x490] sm:$0xff]
        %v420 = vld [vmem:[%s190 + $0x498] sm:$0xff]
        %v421 = vld [vmem:[%s190 + $0x4a0] sm:$0xff]
        %v422 = vld [vmem:[%s190 + $0x4a8] sm:$0xff]
        %v423 = vld [vmem:[%s190 + $0x4b0] sm:$0xff]
        %v424 = vld [vmem:[%s190 + $0x4b8] sm:$0xff]
        %v425 = vld [vmem:[%s190 + $0x4c0] sm:$0xff]
        %v426 = vld [vmem:[%s190 + $0x4c8] sm:$0xff]
        %v427 = vld [vmem:[%s190 + $0x4d0] sm:$0xff]
        %v428 = vld [vmem:[%s190 + $0x4d8] sm:$0xff]
        %v429 = vld [vmem:[%s190 + $0x4e0] sm:$0xff]
        %v430 = vld [vmem:[%s190 + $0x4e8] sm:$0xff]
        %v431 = vld [vmem:[%s190 + $0x4f0] sm:$0xff]
        %v432 = vld [vmem:[%s190 + $0x4f8] sm:$0xff]
        %v433 = vld [vmem:[%s190 + $0x500] sm:$0xff]
        %v434 = vld [vmem:[%s190 + $0x508] sm:$0xff]
        %v435 = vld [vmem:[%s190 + $0x510] sm:$0xff]
        %v436 = vld [vmem:[%s190 + $0x518] sm:$0xff]
        %v437 = vld [vmem:[%s190 + $0x520] sm:$0xff]
        %v438 = vld [vmem:[%s190 + $0x528] sm:$0xff]
        %v439 = vld [vmem:[%s190 + $0x530] sm:$0xff]
        %v440 = vld [vmem:[%s190 + $0x538] sm:$0xff]
        %v441 = vld [vmem:[%s190 + $0x540] sm:$0xff]
        %v442 = vld [vmem:[%s190 + $0x548] sm:$0xff]
        %v443 = vld [vmem:[%s190 + $0x550] sm:$0xff]
        %v444 = vld [vmem:[%s190 + $0x558] sm:$0xff]
        %v445 = vld [vmem:[%s190 + $0x560] sm:$0xff]
        %v446 = vld [vmem:[%s190 + $0x568] sm:$0xff]
        %v447 = vld [vmem:[%s190 + $0x570] sm:$0xff]
        %v448 = vld [vmem:[%s190 + $0x578] sm:$0xff]
        %v449 = vld [vmem:[%s190 + $0x580] sm:$0xff]
        %v450 = vld [vmem:[%s190 + $0x588] sm:$0xff]
        %v451 = vld [vmem:[%s190 + $0x590] sm:$0xff]
        %v452 = vld [vmem:[%s190 + $0x598] sm:$0xff]
        %v453 = vld [vmem:[%s190 + $0x5a0] sm:$0xff]
        %v454 = vld [vmem:[%s190 + $0x5a8] sm:$0xff]
        %v455 = vld [vmem:[%s190 + $0x5b0] sm:$0xff]
        %v456 = vld [vmem:[%s190 + $0x5b8] sm:$0xff]
        %v457 = vld [vmem:[%s190 + $0x5c0] sm:$0xff]
        %v458 = vld [vmem:[%s190 + $0x5c8] sm:$0xff]
        %v459 = vld [vmem:[%s190 + $0x5d0] sm:$0xff]
        %v460 = vld [vmem:[%s190 + $0x5d8] sm:$0xff]
        %v461 = vld [vmem:[%s190 + $0x5e0] sm:$0xff]
        %v462 = vld [vmem:[%s190 + $0x5e8] sm:$0xff]
        %v463 = vld [vmem:[%s190 + $0x5f0] sm:$0xff]
        %v464 = vld [vmem:[%s190 + $0x5f8] sm:$0xff]
        %v465 = vld [vmem:[%s190 + $0x600] sm:$0xff]
        %v466 = vld [vmem:[%s190 + $0x608] sm:$0xff]
        %v467 = vld [vmem:[%s190 + $0x610] sm:$0xff]
        %v468 = vld [vmem:[%s190 + $0x618] sm:$0xff]
        %v469 = vld [vmem:[%s190 + $0x620] sm:$0xff]
        %v470 = vld [vmem:[%s190 + $0x628] sm:$0xff]
        %v471 = vld [vmem:[%s190 + $0x630] sm:$0xff]
        %v472 = vld [vmem:[%s190 + $0x638] sm:$0xff]
        %v473 = vld [vmem:[%s190 + $0x640] sm:$0xff]
        %v474 = vld [vmem:[%s190 + $0x648] sm:$0xff]
        %v475 = vld [vmem:[%s190 + $0x650] sm:$0xff]
        %v476 = vld [vmem:[%s190 + $0x658] sm:$0xff]
        %v477 = vld [vmem:[%s190 + $0x660] sm:$0xff]
        %v478 = vld [vmem:[%s190 + $0x668] sm:$0xff]
        %v479 = vld [vmem:[%s190 + $0x670] sm:$0xff]
        %v480 = vld [vmem:[%s190 + $0x678] sm:$0xff]
        %v481 = vld [vmem:[%s190 + $0x680] sm:$0xff]
        %v482 = vld [vmem:[%s190 + $0x688] sm:$0xff]
        %v483 = vld [vmem:[%s190 + $0x690] sm:$0xff]
        %v484 = vld [vmem:[%s190 + $0x698] sm:$0xff]
        %v485 = vld [vmem:[%s190 + $0x6a0] sm:$0xff]
        %v486 = vld [vmem:[%s190 + $0x6a8] sm:$0xff]
        %v487 = vld [vmem:[%s190 + $0x6b0] sm:$0xff]
        %v488 = vld [vmem:[%s190 + $0x6b8] sm:$0xff]
        %v489 = vld [vmem:[%s190 + $0x6c0] sm:$0xff]
        %v490 = vld [vmem:[%s190 + $0x6c8] sm:$0xff]
        %v491 = vld [vmem:[%s190 + $0x6d0] sm:$0xff]
        %v492 = vld [vmem:[%s190 + $0x6d8] sm:$0xff]
        %v493 = vld [vmem:[%s190 + $0x6e0] sm:$0xff]
        %v494 = vld [vmem:[%s190 + $0x6e8] sm:$0xff]
        %v495 = vld [vmem:[%s190 + $0x6f0] sm:$0xff]
        %v496 = vld [vmem:[%s190 + $0x6f8] sm:$0xff]
        %v497 = vld [vmem:[%s190 + $0x700] sm:$0xff]
        %v498 = vld [vmem:[%s190 + $0x708] sm:$0xff]
        %v499 = vld [vmem:[%s190 + $0x710] sm:$0xff]
        %v500 = vld [vmem:[%s190 + $0x718] sm:$0xff]
        %v501 = vld [vmem:[%s190 + $0x720] sm:$0xff]
        %v502 = vld [vmem:[%s190 + $0x728] sm:$0xff]
        %v503 = vld [vmem:[%s190 + $0x730] sm:$0xff]
        %v504 = vld [vmem:[%s190 + $0x738] sm:$0xff]
        %v505 = vld [vmem:[%s190 + $0x740] sm:$0xff]
        %v506 = vld [vmem:[%s190 + $0x748] sm:$0xff]
        %v507 = vld [vmem:[%s190 + $0x750] sm:$0xff]
        %v508 = vld [vmem:[%s190 + $0x758] sm:$0xff]
        %v509 = vld [vmem:[%s190 + $0x760] sm:$0xff]
        %v510 = vld [vmem:[%s190 + $0x768] sm:$0xff]
        %v511 = vld [vmem:[%s190 + $0x770] sm:$0xff]
        %v512 = vld [vmem:[%s190 + $0x778] sm:$0xff]
        %v513 = vld [vmem:[%s190 + $0x780] sm:$0xff]
        %v514 = vld [vmem:[%s190 + $0x788] sm:$0xff]
        %v515 = vld [vmem:[%s190 + $0x790] sm:$0xff]
        %v516 = vld [vmem:[%s190 + $0x798] sm:$0xff]
        %v517 = vld [vmem:[%s190 + $0x7a0] sm:$0xff]
        %v518 = vld [vmem:[%s190 + $0x7a8] sm:$0xff]
        %v519 = vld [vmem:[%s190 + $0x7b0] sm:$0xff]
        %v520 = vld [vmem:[%s190 + $0x7b8] sm:$0xff]
        %v521 = vld [vmem:[%s190 + $0x7c0] sm:$0xff]
        %v522 = vld [vmem:[%s190 + $0x7c8] sm:$0xff]
        %v523 = vld [vmem:[%s190 + $0x7d0] sm:$0xff]
        %v524 = vld [vmem:[%s190 + $0x7d8] sm:$0xff]
        %v525 = vld [vmem:[%s190 + $0x7e0] sm:$0xff]
        %v526 = vld [vmem:[%s190 + $0x7e8] sm:$0xff]
        %v527 = vld [vmem:[%s190 + $0x7f0] sm:$0xff]
        %v528 = vld [vmem:[%s190 + $0x7f8] sm:$0xff]
        %v529 = vld [vmem:[%s190 + $0x800] sm:$0xff]
        %v530 = vld [vmem:[%s190 + $0x808] sm:$0xff]
        %v531 = vld [vmem:[%s190 + $0x810] sm:$0xff]
        %v532 = vld [vmem:[%s190 + $0x818] sm:$0xff]
        %v533 = vld [vmem:[%s190 + $0x820] sm:$0xff]
        %v534 = vld [vmem:[%s190 + $0x828] sm:$0xff]
        %v535 = vld [vmem:[%s190 + $0x830] sm:$0xff]
        %v536 = vld [vmem:[%s190 + $0x838] sm:$0xff]
        %v537 = vld [vmem:[%s190 + $0x840] sm:$0xff]
        %v538 = vld [vmem:[%s190 + $0x848] sm:$0xff]
        %v539 = vld [vmem:[%s190 + $0x850] sm:$0xff]
        %v540 = vld [vmem:[%s190 + $0x858] sm:$0xff]
        %v541 = vld [vmem:[%s190 + $0x860] sm:$0xff]
        %v542 = vld [vmem:[%s190 + $0x868] sm:$0xff]
        %v543 = vld [vmem:[%s190 + $0x870] sm:$0xff]
        %v544 = vld [vmem:[%s190 + $0x878] sm:$0xff]
        %v545 = vld [vmem:[%s190 + $0x880] sm:$0xff]
        %v546 = vld [vmem:[%s190 + $0x888] sm:$0xff]
        %v547 = vld [vmem:[%s190 + $0x890] sm:$0xff]
        %v548 = vld [vmem:[%s190 + $0x898] sm:$0xff]
        %v549 = vld [vmem:[%s190 + $0x8a0] sm:$0xff]
        %v550 = vld [vmem:[%s190 + $0x8a8] sm:$0xff]
        %v551 = vld [vmem:[%s190 + $0x8b0] sm:$0xff]
        %v552 = vld [vmem:[%s190 + $0x8b8] sm:$0xff]
        %v553 = vld [vmem:[%s190 + $0x8c0] sm:$0xff]
        %v554 = vld [vmem:[%s190 + $0x8c8] sm:$0xff]
        %v555 = vld [vmem:[%s190 + $0x8d0] sm:$0xff]
        %v556 = vld [vmem:[%s190 + $0x8d8] sm:$0xff]
        %v557 = vld [vmem:[%s190 + $0x8e0] sm:$0xff]
        %v558 = vld [vmem:[%s190 + $0x8e8] sm:$0xff]
        %v559 = vld [vmem:[%s190 + $0x8f0] sm:$0xff]
        %v560 = vld [vmem:[%s190 + $0x8f8] sm:$0xff]
        %v561 = vld [vmem:[%s190 + $0x900] sm:$0xff]
        %v562 = vld [vmem:[%s190 + $0x908] sm:$0xff]
        %v563 = vld [vmem:[%s190 + $0x910] sm:$0xff]
        %v564 = vld [vmem:[%s190 + $0x918] sm:$0xff]
        %v565 = vld [vmem:[%s190 + $0x920] sm:$0xff]
        %v566 = vld [vmem:[%s190 + $0x928] sm:$0xff]
        %v567 = vld [vmem:[%s190 + $0x930] sm:$0xff]
        %v568 = vld [vmem:[%s190 + $0x938] sm:$0xff]
        %v569 = vld [vmem:[%s190 + $0x940] sm:$0xff]
        %v570 = vld [vmem:[%s190 + $0x948] sm:$0xff]
        %v571 = vld [vmem:[%s190 + $0x950] sm:$0xff]
        %v572 = vld [vmem:[%s190 + $0x958] sm:$0xff]
        %v573 = vld [vmem:[%s190 + $0x960] sm:$0xff]
        %v574 = vld [vmem:[%s190 + $0x968] sm:$0xff]
        %v575 = vld [vmem:[%s190 + $0x970] sm:$0xff]
        %v576 = vld [vmem:[%s190 + $0x978] sm:$0xff]
        %v577 = vld [vmem:[%s190 + $0x980] sm:$0xff]
        %v578 = vld [vmem:[%s190 + $0x988] sm:$0xff]
        %v579 = vld [vmem:[%s190 + $0x990] sm:$0xff]
        %v580 = vld [vmem:[%s190 + $0x998] sm:$0xff]
        %v581 = vld [vmem:[%s190 + $0x9a0] sm:$0xff]
        %v582 = vld [vmem:[%s190 + $0x9a8] sm:$0xff]
        %v583 = vld [vmem:[%s190 + $0x9b0] sm:$0xff]
        %v584 = vld [vmem:[%s190 + $0x9b8] sm:$0xff]
        %v585 = vld [vmem:[%s190 + $0x9c0] sm:$0xff]
        %v586 = vld [vmem:[%s190 + $0x9c8] sm:$0xff]
        %v587 = vld [vmem:[%s190 + $0x9d0] sm:$0xff]
        %v588 = vld [vmem:[%s190 + $0x9d8] sm:$0xff]
        %v589 = vld [vmem:[%s190 + $0x9e0] sm:$0xff]
        %v590 = vld [vmem:[%s190 + $0x9e8] sm:$0xff]
        %v591 = vld [vmem:[%s190 + $0x9f0] sm:$0xff]
        %v592 = vld [vmem:[%s190 + $0x9f8] sm:$0xff]
        %v593 = vld [vmem:[%s190 + $0xa00] sm:$0xff]
        %v594 = vld [vmem:[%s190 + $0xa08] sm:$0xff]
        %v595 = vld [vmem:[%s190 + $0xa10] sm:$0xff]
        %v596 = vld [vmem:[%s190 + $0xa18] sm:$0xff]
        %v597 = vld [vmem:[%s190 + $0xa20] sm:$0xff]
        %v598 = vld [vmem:[%s190 + $0xa28] sm:$0xff]
        %v599 = vld [vmem:[%s190 + $0xa30] sm:$0xff]
        %v600 = vld [vmem:[%s190 + $0xa38] sm:$0xff]
        %v601 = vld [vmem:[%s190 + $0xa40] sm:$0xff]
        %v602 = vld [vmem:[%s190 + $0xa48] sm:$0xff]
        %v603 = vld [vmem:[%s190 + $0xa50] sm:$0xff]
        %v604 = vld [vmem:[%s190 + $0xa58] sm:$0xff]
        %v605 = vld [vmem:[%s190 + $0xa60] sm:$0xff]
        %v606 = vld [vmem:[%s190 + $0xa68] sm:$0xff]
        %v607 = vld [vmem:[%s190 + $0xa70] sm:$0xff]
        %v608 = vld [vmem:[%s190 + $0xa78] sm:$0xff]
        %v609 = vld [vmem:[%s190 + $0xa80] sm:$0xff]
        %v610 = vld [vmem:[%s190 + $0xa88] sm:$0xff]
        %v611 = vld [vmem:[%s190 + $0xa90] sm:$0xff]
        %v612 = vld [vmem:[%s190 + $0xa98] sm:$0xff]
        %v613 = vld [vmem:[%s190 + $0xaa0] sm:$0xff]
        %v614 = vld [vmem:[%s190 + $0xaa8] sm:$0xff]
        %v615 = vld [vmem:[%s190 + $0xab0] sm:$0xff]
        %v616 = vld [vmem:[%s190 + $0xab8] sm:$0xff]
        %v617 = vld [vmem:[%s190 + $0xac0] sm:$0xff]
        %v618 = vld [vmem:[%s190 + $0xac8] sm:$0xff]
        %v619 = vld [vmem:[%s190 + $0xad0] sm:$0xff]
        %v620 = vld [vmem:[%s190 + $0xad8] sm:$0xff]
        %v621 = vld [vmem:[%s190 + $0xae0] sm:$0xff]
        %v622 = vld [vmem:[%s190 + $0xae8] sm:$0xff]
        %v623 = vld [vmem:[%s190 + $0xaf0] sm:$0xff]
        %v624 = vld [vmem:[%s190 + $0xaf8] sm:$0xff]
        %v625 = vld [vmem:[%s190 + $0xb00] sm:$0xff]
        %v626 = vld [vmem:[%s190 + $0xb08] sm:$0xff]
        %v627 = vld [vmem:[%s190 + $0xb10] sm:$0xff]
        %v628 = vld [vmem:[%s190 + $0xb18] sm:$0xff]
        %v629 = vld [vmem:[%s190 + $0xb20] sm:$0xff]
        %v630 = vld [vmem:[%s190 + $0xb28] sm:$0xff]
        %v631 = vld [vmem:[%s190 + $0xb30] sm:$0xff]
        %v632 = vld [vmem:[%s190 + $0xb38] sm:$0xff]
        %v633 = vld [vmem:[%s190 + $0xb40] sm:$0xff]
        %v634 = vld [vmem:[%s190 + $0xb48] sm:$0xff]
        %v635 = vld [vmem:[%s190 + $0xb50] sm:$0xff]
        %v636 = vld [vmem:[%s190 + $0xb58] sm:$0xff]
        %v637 = vld [vmem:[%s190 + $0xb60] sm:$0xff]
        %v638 = vld [vmem:[%s190 + $0xb68] sm:$0xff]
        %v639 = vld [vmem:[%s190 + $0xb70] sm:$0xff]
        %v640 = vld [vmem:[%s190 + $0xb78] sm:$0xff]
        %v641 = vld [vmem:[%s190 + $0xb80] sm:$0xff]
        %v642 = vld [vmem:[%s190 + $0xb88] sm:$0xff]
        %v643 = vld [vmem:[%s190 + $0xb90] sm:$0xff]
        %v644 = vld [vmem:[%s190 + $0xb98] sm:$0xff]
        %v645 = vld [vmem:[%s190 + $0xba0] sm:$0xff]
        %v646 = vld [vmem:[%s190 + $0xba8] sm:$0xff]
        %v647 = vld [vmem:[%s190 + $0xbb0] sm:$0xff]
        %v648 = vld [vmem:[%s190 + $0xbb8] sm:$0xff]
        %v649 = vld [vmem:[%s190 + $0xbc0] sm:$0xff]
        %v650 = vld [vmem:[%s190 + $0xbc8] sm:$0xff]
        %v651 = vld [vmem:[%s190 + $0xbd0] sm:$0xff]
        %v652 = vld [vmem:[%s190 + $0xbd8] sm:$0xff]
        %v653 = vld [vmem:[%s190 + $0xbe0] sm:$0xff]
        %v654 = vld [vmem:[%s190 + $0xbe8] sm:$0xff]
        %v655 = vld [vmem:[%s190 + $0xbf0] sm:$0xff]
        %v656 = vld [vmem:[%s190 + $0xbf8] sm:$0xff]
        %v657 = vld [vmem:[%s190 + $0xc00] sm:$0xff]
        %v658 = vld [vmem:[%s190 + $0xc08] sm:$0xff]
        %v659 = vld [vmem:[%s190 + $0xc10] sm:$0xff]
        %v660 = vld [vmem:[%s190 + $0xc18] sm:$0xff]
        %v661 = vld [vmem:[%s190 + $0xc20] sm:$0xff]
        %v662 = vld [vmem:[%s190 + $0xc28] sm:$0xff]
        %v663 = vld [vmem:[%s190 + $0xc30] sm:$0xff]
        %v664 = vld [vmem:[%s190 + $0xc38] sm:$0xff]
        %v665 = vld [vmem:[%s190 + $0xc40] sm:$0xff]
        %v666 = vld [vmem:[%s190 + $0xc48] sm:$0xff]
        %v667 = vld [vmem:[%s190 + $0xc50] sm:$0xff]
        %v668 = vld [vmem:[%s190 + $0xc58] sm:$0xff]
        %v669 = vld [vmem:[%s190 + $0xc60] sm:$0xff]
        %v670 = vld [vmem:[%s190 + $0xc68] sm:$0xff]
        %v671 = vld [vmem:[%s190 + $0xc70] sm:$0xff]
        %v672 = vld [vmem:[%s190 + $0xc78] sm:$0xff]
        %v673 = vld [vmem:[%s190 + $0xc80] sm:$0xff]
        %v674 = vld [vmem:[%s190 + $0xc88] sm:$0xff]
        %v675 = vld [vmem:[%s190 + $0xc90] sm:$0xff]
        %v676 = vld [vmem:[%s190 + $0xc98] sm:$0xff]
        %v677 = vld [vmem:[%s190 + $0xca0] sm:$0xff]
        %v678 = vld [vmem:[%s190 + $0xca8] sm:$0xff]
        %v679 = vld [vmem:[%s190 + $0xcb0] sm:$0xff]
        %v680 = vld [vmem:[%s190 + $0xcb8] sm:$0xff]
        %v681 = vld [vmem:[%s190 + $0xcc0] sm:$0xff]
        %v682 = vld [vmem:[%s190 + $0xcc8] sm:$0xff]
        %v683 = vld [vmem:[%s190 + $0xcd0] sm:$0xff]
        %v684 = vld [vmem:[%s190 + $0xcd8] sm:$0xff]
        %v685 = vld [vmem:[%s190 + $0xce0] sm:$0xff]
        %v686 = vld [vmem:[%s190 + $0xce8] sm:$0xff]
        %v687 = vld [vmem:[%s190 + $0xcf0] sm:$0xff]
        %v688 = vld [vmem:[%s190 + $0xcf8] sm:$0xff]
        %v689 = vld [vmem:[%s190 + $0xd00] sm:$0xff]
        %v690 = vld [vmem:[%s190 + $0xd08] sm:$0xff]
        %v691 = vld [vmem:[%s190 + $0xd10] sm:$0xff]
        %v692 = vld [vmem:[%s190 + $0xd18] sm:$0xff]
        %v693 = vld [vmem:[%s190 + $0xd20] sm:$0xff]
        %v694 = vld [vmem:[%s190 + $0xd28] sm:$0xff]
        %v695 = vld [vmem:[%s190 + $0xd30] sm:$0xff]
        %v696 = vld [vmem:[%s190 + $0xd38] sm:$0xff]
        %v697 = vld [vmem:[%s190 + $0xd40] sm:$0xff]
        %v698 = vld [vmem:[%s190 + $0xd48] sm:$0xff]
        %v699 = vld [vmem:[%s190 + $0xd50] sm:$0xff]
        %v700 = vld [vmem:[%s190 + $0xd58] sm:$0xff]
        %v701 = vld [vmem:[%s190 + $0xd60] sm:$0xff]
        %v702 = vld [vmem:[%s190 + $0xd68] sm:$0xff]
        %v703 = vld [vmem:[%s190 + $0xd70] sm:$0xff]
        %v704 = vld [vmem:[%s190 + $0xd78] sm:$0xff]
        %v705 = vld [vmem:[%s190 + $0xd80] sm:$0xff]
        %v706 = vld [vmem:[%s190 + $0xd88] sm:$0xff]
        %v707 = vld [vmem:[%s190 + $0xd90] sm:$0xff]
        %v708 = vld [vmem:[%s190 + $0xd98] sm:$0xff]
        %v709 = vld [vmem:[%s190 + $0xda0] sm:$0xff]
        %v710 = vld [vmem:[%s190 + $0xda8] sm:$0xff]
        %v711 = vld [vmem:[%s190 + $0xdb0] sm:$0xff]
        %v712 = vld [vmem:[%s190 + $0xdb8] sm:$0xff]
        %v713 = vld [vmem:[%s190 + $0xdc0] sm:$0xff]
        %v714 = vld [vmem:[%s190 + $0xdc8] sm:$0xff]
        %v715 = vld [vmem:[%s190 + $0xdd0] sm:$0xff]
        %v716 = vld [vmem:[%s190 + $0xdd8] sm:$0xff]
        %v717 = vld [vmem:[%s190 + $0xde0] sm:$0xff]
        %v718 = vld [vmem:[%s190 + $0xde8] sm:$0xff]
        %v719 = vld [vmem:[%s190 + $0xdf0] sm:$0xff]
        %v720 = vld [vmem:[%s190 + $0xdf8] sm:$0xff]
        %v721 = vld [vmem:[%s190 + $0xe00] sm:$0xff]
        %v722 = vld [vmem:[%s190 + $0xe08] sm:$0xff]
        %v723 = vld [vmem:[%s190 + $0xe10] sm:$0xff]
        %v724 = vld [vmem:[%s190 + $0xe18] sm:$0xff]
        %v725 = vld [vmem:[%s190 + $0xe20] sm:$0xff]
        %v726 = vld [vmem:[%s190 + $0xe28] sm:$0xff]
        %v727 = vld [vmem:[%s190 + $0xe30] sm:$0xff]
        %v728 = vld [vmem:[%s190 + $0xe38] sm:$0xff]
        %v729 = vld [vmem:[%s190 + $0xe40] sm:$0xff]
        %v730 = vld [vmem:[%s190 + $0xe48] sm:$0xff]
        %v731 = vld [vmem:[%s190 + $0xe50] sm:$0xff]
        %v732 = vld [vmem:[%s190 + $0xe58] sm:$0xff]
        %v733 = vld [vmem:[%s190 + $0xe60] sm:$0xff]
        %v734 = vld [vmem:[%s190 + $0xe68] sm:$0xff]
        %v735 = vld [vmem:[%s190 + $0xe70] sm:$0xff]
        %v736 = vld [vmem:[%s190 + $0xe78] sm:$0xff]
        %v737 = vld [vmem:[%s190 + $0xe80] sm:$0xff]
        %v738 = vld [vmem:[%s190 + $0xe88] sm:$0xff]
        %v739 = vld [vmem:[%s190 + $0xe90] sm:$0xff]
        %v740 = vld [vmem:[%s190 + $0xe98] sm:$0xff]
        %v741 = vld [vmem:[%s190 + $0xea0] sm:$0xff]
        %v742 = vld [vmem:[%s190 + $0xea8] sm:$0xff]
        %v743 = vld [vmem:[%s190 + $0xeb0] sm:$0xff]
        %v744 = vld [vmem:[%s190 + $0xeb8] sm:$0xff]
        %v745 = vld [vmem:[%s190 + $0xec0] sm:$0xff]
        %v746 = vld [vmem:[%s190 + $0xec8] sm:$0xff]
        %v747 = vld [vmem:[%s190 + $0xed0] sm:$0xff]
        %v748 = vld [vmem:[%s190 + $0xed8] sm:$0xff]
        %v749 = vld [vmem:[%s190 + $0xee0] sm:$0xff]
        %v750 = vld [vmem:[%s190 + $0xee8] sm:$0xff]
        %v751 = vld [vmem:[%s190 + $0xef0] sm:$0xff]
        %v752 = vld [vmem:[%s190 + $0xef8] sm:$0xff]
        %v753 = vld [vmem:[%s190 + $0xf00] sm:$0xff]
        %v754 = vld [vmem:[%s190 + $0xf08] sm:$0xff]
        %v755 = vld [vmem:[%s190 + $0xf10] sm:$0xff]
        %v756 = vld [vmem:[%s190 + $0xf18] sm:$0xff]
        %v757 = vld [vmem:[%s190 + $0xf20] sm:$0xff]
        %v758 = vld [vmem:[%s190 + $0xf28] sm:$0xff]
        %v759 = vld [vmem:[%s190 + $0xf30] sm:$0xff]
        %v760 = vld [vmem:[%s190 + $0xf38] sm:$0xff]
        %v761 = vld [vmem:[%s190 + $0xf40] sm:$0xff]
        %v762 = vld [vmem:[%s190 + $0xf48] sm:$0xff]
        %v763 = vld [vmem:[%s190 + $0xf50] sm:$0xff]
        %v764 = vld [vmem:[%s190 + $0xf58] sm:$0xff]
        %v765 = vld [vmem:[%s190 + $0xf60] sm:$0xff]
        %v766 = vld [vmem:[%s190 + $0xf68] sm:$0xff]
        %v767 = vld [vmem:[%s190 + $0xf70] sm:$0xff]
        %v768 = vld [vmem:[%s190 + $0xf78] sm:$0xff]
        %v769 = vld [vmem:[%s190 + $0xf80] sm:$0xff]
        %v770 = vld [vmem:[%s190 + $0xf88] sm:$0xff]
        %v771 = vld [vmem:[%s190 + $0xf90] sm:$0xff]
        %v772 = vld [vmem:[%s190 + $0xf98] sm:$0xff]
        %v773 = vld [vmem:[%s190 + $0xfa0] sm:$0xff]
        %v774 = vld [vmem:[%s190 + $0xfa8] sm:$0xff]
        %v775 = vld [vmem:[%s190 + $0xfb0] sm:$0xff]
        %v776 = vld [vmem:[%s190 + $0xfb8] sm:$0xff]
        %v777 = vld [vmem:[%s190 + $0xfc0] sm:$0xff]
        %v778 = vld [vmem:[%s190 + $0xfc8] sm:$0xff]
        %v779 = vld [vmem:[%s190 + $0xfd0] sm:$0xff]
        %v780 = vld [vmem:[%s190 + $0xfd8] sm:$0xff]
        %v781 = vld [vmem:[%s190 + $0xfe0] sm:$0xff]
        %v782 = vld [vmem:[%s190 + $0xfe8] sm:$0xff]
        %v783 = vld [vmem:[%s190 + $0xff0] sm:$0xff]
        %v784 = vld [vmem:[%s190 + $0xff8] sm:$0xff]
        %785 = vmatprep.subr.mxu0 %v274
        %786 = vmatpush1.xpose.msra.mxu0 %v273
        %787 = vmatprep.subr.mxu0 %v282
        %788 = vmatpush1.xpose.msra.mxu0 %v281
        %789 = vmatprep.subr.mxu0 %v290
        %790 = vmatpush1.xpose.msra.mxu0 %v289
        %791 = vmatprep.subr.mxu0 %v298
        %792 = vmatpush1.xpose.msra.mxu0 %v297
        %793 = vmatprep.subr.mxu0 %v306
        %794 = vmatpush1.xpose.msra.mxu0 %v305
        %795 = vmatprep.subr.mxu0 %v314
        %796 = vmatpush1.xpose.msra.mxu0 %v313
        %797 = vmatprep.subr.mxu0 %v322
        %798 = vmatpush1.xpose.msra.mxu0 %v321
        %799 = vmatprep.subr.mxu0 %v330
        %800 = vmatpush1.xpose.msra.mxu0 %v329
        %801 = vmatprep.subr.mxu0 %v338
        %802 = vmatpush1.xpose.msra.mxu0 %v337
        %803 = vmatprep.subr.mxu0 %v346
        %804 = vmatpush1.xpose.msra.mxu0 %v345
        %805 = vmatprep.subr.mxu0 %v354
        %806 = vmatpush1.xpose.msra.mxu0 %v353
        %807 = vmatprep.subr.mxu0 %v362
        %808 = vmatpush1.xpose.msra.mxu0 %v361
        %809 = vmatprep.subr.mxu0 %v370
        %810 = vmatpush1.xpose.msra.mxu0 %v369
        %811 = vmatprep.subr.mxu0 %v378
        %812 = vmatpush1.xpose.msra.mxu0 %v377
        %813 = vmatprep.subr.mxu0 %v386
        %814 = vmatpush1.xpose.msra.mxu0 %v385
        %815 = vmatprep.subr.mxu0 %v394
        %816 = vmatpush1.xpose.msra.mxu0 %v393
        %817 = vmatprep.subr.mxu0 %v402
        %818 = vmatpush1.xpose.msra.mxu0 %v401
        %819 = vmatprep.subr.mxu0 %v410
        %820 = vmatpush1.xpose.msra.mxu0 %v409
        %821 = vmatprep.subr.mxu0 %v418
        %822 = vmatpush1.xpose.msra.mxu0 %v417
        %823 = vmatprep.subr.mxu0 %v426
        %824 = vmatpush1.xpose.msra.mxu0 %v425
        %825 = vmatprep.subr.mxu0 %v434
        %826 = vmatpush1.xpose.msra.mxu0 %v433
        %827 = vmatprep.subr.mxu0 %v442
        %828 = vmatpush1.xpose.msra.mxu0 %v441
        %829 = vmatprep.subr.mxu0 %v450
        %830 = vmatpush1.xpose.msra.mxu0 %v449
        %831 = vmatprep.subr.mxu0 %v458
        %832 = vmatpush1.xpose.msra.mxu0 %v457
        %833 = vmatprep.subr.mxu0 %v466
        %834 = vmatpush1.xpose.msra.mxu0 %v465
        %835 = vmatprep.subr.mxu0 %v474
        %836 = vmatpush1.xpose.msra.mxu0 %v473
        %837 = vmatprep.subr.mxu0 %v482
        %838 = vmatpush1.xpose.msra.mxu0 %v481
        %839 = vmatprep.subr.mxu0 %v490
        %840 = vmatpush1.xpose.msra.mxu0 %v489
        %841 = vmatprep.subr.mxu0 %v498
        %842 = vmatpush1.xpose.msra.mxu0 %v497
        %843 = vmatprep.subr.mxu0 %v506
        %844 = vmatpush1.xpose.msra.mxu0 %v505
        %845 = vmatprep.subr.mxu0 %v514
        %846 = vmatpush1.xpose.msra.mxu0 %v513
        %847 = vmatprep.subr.mxu0 %v522
        %848 = vmatpush1.xpose.msra.mxu0 %v521
        %849 = vmatprep.mubr.f32.mxu0 %v266
        %850 = vmatmul.mubr.f32.gmra.mrb[0].mxu0 %v265
        %v851 = vpop.f32.mrb[0].mxu0
        %v852 = vadd.f32 0.0, %v851
        %v853 = vpop.f32.mrb[0].mxu0
        %v854 = vadd.f32 0.0, %v853
        %855 = vdwg.mxu0
        %856 = vmatprep.subr.mxu0 %v276
        %857 = vmatpush1.xpose.msra.mxu0 %v275
        %858 = vmatprep.subr.mxu0 %v284
        %859 = vmatpush1.xpose.msra.mxu0 %v283
        %860 = vmatprep.subr.mxu0 %v292
        %861 = vmatpush1.xpose.msra.mxu0 %v291
        %862 = vmatprep.subr.mxu0 %v300
        %863 = vmatpush1.xpose.msra.mxu0 %v299
        %864 = vmatprep.subr.mxu0 %v308
        %865 = vmatpush1.xpose.msra.mxu0 %v307
        %866 = vmatprep.subr.mxu0 %v316
        %867 = vmatpush1.xpose.msra.mxu0 %v315
        %868 = vmatprep.subr.mxu0 %v324
        %869 = vmatpush1.xpose.msra.mxu0 %v323
        %870 = vmatprep.subr.mxu0 %v332
        %871 = vmatpush1.xpose.msra.mxu0 %v331
        %872 = vmatprep.subr.mxu0 %v340
        %873 = vmatpush1.xpose.msra.mxu0 %v339
        %874 = vmatprep.subr.mxu0 %v348
        %875 = vmatpush1.xpose.msra.mxu0 %v347
        %876 = vmatprep.subr.mxu0 %v356
        %877 = vmatpush1.xpose.msra.mxu0 %v355
        %878 = vmatprep.subr.mxu0 %v364
        %879 = vmatpush1.xpose.msra.mxu0 %v363
        %880 = vmatprep.subr.mxu0 %v372
        %881 = vmatpush1.xpose.msra.mxu0 %v371
        %882 = vmatprep.subr.mxu0 %v380
        %883 = vmatpush1.xpose.msra.mxu0 %v379
        %884 = vmatprep.subr.mxu0 %v388
        %885 = vmatpush1.xpose.msra.mxu0 %v387
        %886 = vmatprep.subr.mxu0 %v396
        %887 = vmatpush1.xpose.msra.mxu0 %v395
        %888 = vmatprep.subr.mxu0 %v404
        %889 = vmatpush1.xpose.msra.mxu0 %v403
        %890 = vmatprep.subr.mxu0 %v412
        %891 = vmatpush1.xpose.msra.mxu0 %v411
        %892 = vmatprep.subr.mxu0 %v420
        %893 = vmatpush1.xpose.msra.mxu0 %v419
        %894 = vmatprep.subr.mxu0 %v428
        %895 = vmatpush1.xpose.msra.mxu0 %v427
        %896 = vmatprep.subr.mxu0 %v436
        %897 = vmatpush1.xpose.msra.mxu0 %v435
        %898 = vmatprep.subr.mxu0 %v444
        %899 = vmatpush1.xpose.msra.mxu0 %v443
        %900 = vmatprep.subr.mxu0 %v452
        %901 = vmatpush1.xpose.msra.mxu0 %v451
        %902 = vmatprep.subr.mxu0 %v460
        %903 = vmatpush1.xpose.msra.mxu0 %v459
        %904 = vmatprep.subr.mxu0 %v468
        %905 = vmatpush1.xpose.msra.mxu0 %v467
        %906 = vmatprep.subr.mxu0 %v476
        %907 = vmatpush1.xpose.msra.mxu0 %v475
        %908 = vmatprep.subr.mxu0 %v484
        %909 = vmatpush1.xpose.msra.mxu0 %v483
        %910 = vmatprep.subr.mxu0 %v492
        %911 = vmatpush1.xpose.msra.mxu0 %v491
        %912 = vmatprep.subr.mxu0 %v500
        %913 = vmatpush1.xpose.msra.mxu0 %v499
        %914 = vmatprep.subr.mxu0 %v508
        %915 = vmatpush1.xpose.msra.mxu0 %v507
        %916 = vmatprep.subr.mxu0 %v516
        %917 = vmatpush1.xpose.msra.mxu0 %v515
        %918 = vmatprep.subr.mxu0 %v524
        %919 = vmatpush1.xpose.msra.mxu0 %v523
        %920 = vmatprep.mubr.f32.mxu0 %v268
        %921 = vmatmul.mubr.f32.gmra.mrb[0].mxu0 %v267
        %v922 = vpop.f32.mrb[0].mxu0
        %v923 = vadd.f32 %v852, %v922
        %v924 = vpop.f32.mrb[0].mxu0
        %v925 = vadd.f32 %v854, %v924
        %926 = vdwg.mxu0
        %927 = vmatprep.subr.mxu0 %v278
        %928 = vmatpush1.xpose.msra.mxu0 %v277
        %929 = vmatprep.subr.mxu0 %v286
        %930 = vmatpush1.xpose.msra.mxu0 %v285
        %931 = vmatprep.subr.mxu0 %v294
        %932 = vmatpush1.xpose.msra.mxu0 %v293
        %933 = vmatprep.subr.mxu0 %v302
        %934 = vmatpush1.xpose.msra.mxu0 %v301
        %935 = vmatprep.subr.mxu0 %v310
        %936 = vmatpush1.xpose.msra.mxu0 %v309
        %937 = vmatprep.subr.mxu0 %v318
        %938 = vmatpush1.xpose.msra.mxu0 %v317
        %939 = vmatprep.subr.mxu0 %v326
        %940 = vmatpush1.xpose.msra.mxu0 %v325
        %941 = vmatprep.subr.mxu0 %v334
        %942 = vmatpush1.xpose.msra.mxu0 %v333
        %943 = vmatprep.subr.mxu0 %v342
        %944 = vmatpush1.xpose.msra.mxu0 %v341
        %945 = vmatprep.subr.mxu0 %v350
        %946 = vmatpush1.xpose.msra.mxu0 %v349
        %947 = vmatprep.subr.mxu0 %v358
        %948 = vmatpush1.xpose.msra.mxu0 %v357
        %949 = vmatprep.subr.mxu0 %v366
        %950 = vmatpush1.xpose.msra.mxu0 %v365
        %951 = vmatprep.subr.mxu0 %v374
        %952 = vmatpush1.xpose.msra.mxu0 %v373
        %953 = vmatprep.subr.mxu0 %v382
        %954 = vmatpush1.xpose.msra.mxu0 %v381
        %955 = vmatprep.subr.mxu0 %v390
        %956 = vmatpush1.xpose.msra.mxu0 %v389
        %957 = vmatprep.subr.mxu0 %v398
        %958 = vmatpush1.xpose.msra.mxu0 %v397
        %959 = vmatprep.subr.mxu0 %v406
        %960 = vmatpush1.xpose.msra.mxu0 %v405
        %961 = vmatprep.subr.mxu0 %v414
        %962 = vmatpush1.xpose.msra.mxu0 %v413
        %963 = vmatprep.subr.mxu0 %v422
        %964 = vmatpush1.xpose.msra.mxu0 %v421
        %965 = vmatprep.subr.mxu0 %v430
        %966 = vmatpush1.xpose.msra.mxu0 %v429
        %967 = vmatprep.subr.mxu0 %v438
        %968 = vmatpush1.xpose.msra.mxu0 %v437
        %969 = vmatprep.subr.mxu0 %v446
        %970 = vmatpush1.xpose.msra.mxu0 %v445
        %971 = vmatprep.subr.mxu0 %v454
        %972 = vmatpush1.xpose.msra.mxu0 %v453
        %973 = vmatprep.subr.mxu0 %v462
        %974 = vmatpush1.xpose.msra.mxu0 %v461
        %975 = vmatprep.subr.mxu0 %v470
        %976 = vmatpush1.xpose.msra.mxu0 %v469
        %977 = vmatprep.subr.mxu0 %v478
        %978 = vmatpush1.xpose.msra.mxu0 %v477
        %979 = vmatprep.subr.mxu0 %v486
        %980 = vmatpush1.xpose.msra.mxu0 %v485
        %981 = vmatprep.subr.mxu0 %v494
        %982 = vmatpush1.xpose.msra.mxu0 %v493
        %983 = vmatprep.subr.mxu0 %v502
        %984 = vmatpush1.xpose.msra.mxu0 %v501
        %985 = vmatprep.subr.mxu0 %v510
        %986 = vmatpush1.xpose.msra.mxu0 %v509
        %987 = vmatprep.subr.mxu0 %v518
        %988 = vmatpush1.xpose.msra.mxu0 %v517
        %989 = vmatprep.subr.mxu0 %v526
        %990 = vmatpush1.xpose.msra.mxu0 %v525
        %991 = vmatprep.mubr.f32.mxu0 %v270
        %992 = vmatmul.mubr.f32.gmra.mrb[0].mxu0 %v269
        %v993 = vpop.f32.mrb[0].mxu0
        %v994 = vadd.f32 %v923, %v993
        %v995 = vpop.f32.mrb[0].mxu0
        %v996 = vadd.f32 %v925, %v995
        %997 = vdwg.mxu0
        %998 = vmatprep.subr.mxu0 %v280
        %999 = vmatpush1.xpose.msra.mxu0 %v279
        %1000 = vmatprep.subr.mxu0 %v288
        %1001 = vmatpush1.xpose.msra.mxu0 %v287
        %1002 = vmatprep.subr.mxu0 %v296
        %1003 = vmatpush1.xpose.msra.mxu0 %v295
        %1004 = vmatprep.subr.mxu0 %v304
        %1005 = vmatpush1.xpose.msra.mxu0 %v303
        %1006 = vmatprep.subr.mxu0 %v312
        %1007 = vmatpush1.xpose.msra.mxu0 %v311
        %1008 = vmatprep.subr.mxu0 %v320
        %1009 = vmatpush1.xpose.msra.mxu0 %v319
        %1010 = vmatprep.subr.mxu0 %v328
        %1011 = vmatpush1.xpose.msra.mxu0 %v327
        %1012 = vmatprep.subr.mxu0 %v336
        %1013 = vmatpush1.xpose.msra.mxu0 %v335
        %1014 = vmatprep.subr.mxu0 %v344
        %1015 = vmatpush1.xpose.msra.mxu0 %v343
        %1016 = vmatprep.subr.mxu0 %v352
        %1017 = vmatpush1.xpose.msra.mxu0 %v351
        %1018 = vmatprep.subr.mxu0 %v360
        %1019 = vmatpush1.xpose.msra.mxu0 %v359
        %1020 = vmatprep.subr.mxu0 %v368
        %1021 = vmatpush1.xpose.msra.mxu0 %v367
        %1022 = vmatprep.subr.mxu0 %v376
        %1023 = vmatpush1.xpose.msra.mxu0 %v375
        %1024 = vmatprep.subr.mxu0 %v384
        %1025 = vmatpush1.xpose.msra.mxu0 %v383
        %1026 = vmatprep.subr.mxu0 %v392
        %1027 = vmatpush1.xpose.msra.mxu0 %v391
        %1028 = vmatprep.subr.mxu0 %v400
        %1029 = vmatpush1.xpose.msra.mxu0 %v399
        %1030 = vmatprep.subr.mxu0 %v408
        %1031 = vmatpush1.xpose.msra.mxu0 %v407
        %1032 = vmatprep.subr.mxu0 %v416
        %1033 = vmatpush1.xpose.msra.mxu0 %v415
        %1034 = vmatprep.subr.mxu0 %v424
        %1035 = vmatpush1.xpose.msra.mxu0 %v423
        %1036 = vmatprep.subr.mxu0 %v432
        %1037 = vmatpush1.xpose.msra.mxu0 %v431
        %1038 = vmatprep.subr.mxu0 %v440
        %1039 = vmatpush1.xpose.msra.mxu0 %v439
        %1040 = vmatprep.subr.mxu0 %v448
        %1041 = vmatpush1.xpose.msra.mxu0 %v447
        %1042 = vmatprep.subr.mxu0 %v456
        %1043 = vmatpush1.xpose.msra.mxu0 %v455
        %1044 = vmatprep.subr.mxu0 %v464
        %1045 = vmatpush1.xpose.msra.mxu0 %v463
        %1046 = vmatprep.subr.mxu0 %v472
        %1047 = vmatpush1.xpose.msra.mxu0 %v471
        %1048 = vmatprep.subr.mxu0 %v480
        %1049 = vmatpush1.xpose.msra.mxu0 %v479
        %1050 = vmatprep.subr.mxu0 %v488
        %1051 = vmatpush1.xpose.msra.mxu0 %v487
        %1052 = vmatprep.subr.mxu0 %v496
        %1053 = vmatpush1.xpose.msra.mxu0 %v495
        %1054 = vmatprep.subr.mxu0 %v504
        %1055 = vmatpush1.xpose.msra.mxu0 %v503
        %1056 = vmatprep.subr.mxu0 %v512
        %1057 = vmatpush1.xpose.msra.mxu0 %v511
        %1058 = vmatprep.subr.mxu0 %v520
        %1059 = vmatpush1.xpose.msra.mxu0 %v519
        %1060 = vmatprep.subr.mxu0 %v528
        %1061 = vmatpush1.xpose.msra.mxu0 %v527
        %1062 = vmatprep.mubr.f32.mxu0 %v272
        %1063 = vmatmul.mubr.f32.gmra.mrb[0].mxu0 %v271
        %v1064 = vpop.f32.mrb[0].mxu0
        %v1065 = vadd.f32 %v994, %v1064
        %v1066 = vpop.f32.mrb[0].mxu0
        %v1067 = vadd.f32 %v996, %v1066
        %1068 = vdwg.mxu0
        %1069 = vmatprep.subr.mxu0 %v530
        %1070 = vmatpush1.xpose.msra.mxu0 %v529
        %1071 = vmatprep.subr.mxu0 %v538
        %1072 = vmatpush1.xpose.msra.mxu0 %v537
        %1073 = vmatprep.subr.mxu0 %v546
        %1074 = vmatpush1.xpose.msra.mxu0 %v545
        %1075 = vmatprep.subr.mxu0 %v554
        %1076 = vmatpush1.xpose.msra.mxu0 %v553
        %1077 = vmatprep.subr.mxu0 %v562
        %1078 = vmatpush1.xpose.msra.mxu0 %v561
        %1079 = vmatprep.subr.mxu0 %v570
        %1080 = vmatpush1.xpose.msra.mxu0 %v569
        %1081 = vmatprep.subr.mxu0 %v578
        %1082 = vmatpush1.xpose.msra.mxu0 %v577
        %1083 = vmatprep.subr.mxu0 %v586
        %1084 = vmatpush1.xpose.msra.mxu0 %v585
        %1085 = vmatprep.subr.mxu0 %v594
        %1086 = vmatpush1.xpose.msra.mxu0 %v593
        %1087 = vmatprep.subr.mxu0 %v602
        %1088 = vmatpush1.xpose.msra.mxu0 %v601
        %1089 = vmatprep.subr.mxu0 %v610
        %1090 = vmatpush1.xpose.msra.mxu0 %v609
        %1091 = vmatprep.subr.mxu0 %v618
        %1092 = vmatpush1.xpose.msra.mxu0 %v617
        %1093 = vmatprep.subr.mxu0 %v626
        %1094 = vmatpush1.xpose.msra.mxu0 %v625
        %1095 = vmatprep.subr.mxu0 %v634
        %1096 = vmatpush1.xpose.msra.mxu0 %v633
        %1097 = vmatprep.subr.mxu0 %v642
        %1098 = vmatpush1.xpose.msra.mxu0 %v641
        %1099 = vmatprep.subr.mxu0 %v650
        %1100 = vmatpush1.xpose.msra.mxu0 %v649
        %1101 = vmatprep.subr.mxu0 %v658
        %1102 = vmatpush1.xpose.msra.mxu0 %v657
        %1103 = vmatprep.subr.mxu0 %v666
        %1104 = vmatpush1.xpose.msra.mxu0 %v665
        %1105 = vmatprep.subr.mxu0 %v674
        %1106 = vmatpush1.xpose.msra.mxu0 %v673
        %1107 = vmatprep.subr.mxu0 %v682
        %1108 = vmatpush1.xpose.msra.mxu0 %v681
        %1109 = vmatprep.subr.mxu0 %v690
        %1110 = vmatpush1.xpose.msra.mxu0 %v689
        %1111 = vmatprep.subr.mxu0 %v698
        %1112 = vmatpush1.xpose.msra.mxu0 %v697
        %1113 = vmatprep.subr.mxu0 %v706
        %1114 = vmatpush1.xpose.msra.mxu0 %v705
        %1115 = vmatprep.subr.mxu0 %v714
        %1116 = vmatpush1.xpose.msra.mxu0 %v713
        %1117 = vmatprep.subr.mxu0 %v722
        %1118 = vmatpush1.xpose.msra.mxu0 %v721
        %1119 = vmatprep.subr.mxu0 %v730
        %1120 = vmatpush1.xpose.msra.mxu0 %v729
        %1121 = vmatprep.subr.mxu0 %v738
        %1122 = vmatpush1.xpose.msra.mxu0 %v737
        %1123 = vmatprep.subr.mxu0 %v746
        %1124 = vmatpush1.xpose.msra.mxu0 %v745
        %1125 = vmatprep.subr.mxu0 %v754
        %1126 = vmatpush1.xpose.msra.mxu0 %v753
        %1127 = vmatprep.subr.mxu0 %v762
        %1128 = vmatpush1.xpose.msra.mxu0 %v761
        %1129 = vmatprep.subr.mxu0 %v770
        %1130 = vmatpush1.xpose.msra.mxu0 %v769
        %1131 = vmatprep.subr.mxu0 %v778
        %1132 = vmatpush1.xpose.msra.mxu0 %v777
        %1133 = vmatprep.mubr.f32.mxu0 %v266
        %1134 = vmatmul.mubr.f32.gmra.mrb[0].mxu0 %v265
        %v1135 = vpop.f32.mrb[0].mxu0
        %v1136 = vadd.f32 0.0, %v1135
        %v1137 = vpop.f32.mrb[0].mxu0
        %v1138 = vadd.f32 0.0, %v1137
        %1139 = vdwg.mxu0
        %1140 = vmatprep.subr.mxu0 %v532
        %1141 = vmatpush1.xpose.msra.mxu0 %v531
        %1142 = vmatprep.subr.mxu0 %v540
        %1143 = vmatpush1.xpose.msra.mxu0 %v539
        %1144 = vmatprep.subr.mxu0 %v548
        %1145 = vmatpush1.xpose.msra.mxu0 %v547
        %1146 = vmatprep.subr.mxu0 %v556
        %1147 = vmatpush1.xpose.msra.mxu0 %v555
        %1148 = vmatprep.subr.mxu0 %v564
        %1149 = vmatpush1.xpose.msra.mxu0 %v563
        %1150 = vmatprep.subr.mxu0 %v572
        %1151 = vmatpush1.xpose.msra.mxu0 %v571
        %1152 = vmatprep.subr.mxu0 %v580
        %1153 = vmatpush1.xpose.msra.mxu0 %v579
        %1154 = vmatprep.subr.mxu0 %v588
        %1155 = vmatpush1.xpose.msra.mxu0 %v587
        %1156 = vmatprep.subr.mxu0 %v596
        %1157 = vmatpush1.xpose.msra.mxu0 %v595
        %1158 = vmatprep.subr.mxu0 %v604
        %1159 = vmatpush1.xpose.msra.mxu0 %v603
        %1160 = vmatprep.subr.mxu0 %v612
        %1161 = vmatpush1.xpose.msra.mxu0 %v611
        %1162 = vmatprep.subr.mxu0 %v620
        %1163 = vmatpush1.xpose.msra.mxu0 %v619
        %1164 = vmatprep.subr.mxu0 %v628
        %1165 = vmatpush1.xpose.msra.mxu0 %v627
        %1166 = vmatprep.subr.mxu0 %v636
        %1167 = vmatpush1.xpose.msra.mxu0 %v635
        %1168 = vmatprep.subr.mxu0 %v644
        %1169 = vmatpush1.xpose.msra.mxu0 %v643
        %1170 = vmatprep.subr.mxu0 %v652
        %1171 = vmatpush1.xpose.msra.mxu0 %v651
        %1172 = vmatprep.subr.mxu0 %v660
        %1173 = vmatpush1.xpose.msra.mxu0 %v659
        %1174 = vmatprep.subr.mxu0 %v668
        %1175 = vmatpush1.xpose.msra.mxu0 %v667
        %1176 = vmatprep.subr.mxu0 %v676
        %1177 = vmatpush1.xpose.msra.mxu0 %v675
        %1178 = vmatprep.subr.mxu0 %v684
        %1179 = vmatpush1.xpose.msra.mxu0 %v683
        %1180 = vmatprep.subr.mxu0 %v692
        %1181 = vmatpush1.xpose.msra.mxu0 %v691
        %1182 = vmatprep.subr.mxu0 %v700
        %1183 = vmatpush1.xpose.msra.mxu0 %v699
        %1184 = vmatprep.subr.mxu0 %v708
        %1185 = vmatpush1.xpose.msra.mxu0 %v707
        %1186 = vmatprep.subr.mxu0 %v716
        %1187 = vmatpush1.xpose.msra.mxu0 %v715
        %1188 = vmatprep.subr.mxu0 %v724
        %1189 = vmatpush1.xpose.msra.mxu0 %v723
        %1190 = vmatprep.subr.mxu0 %v732
        %1191 = vmatpush1.xpose.msra.mxu0 %v731
        %1192 = vmatprep.subr.mxu0 %v740
        %1193 = vmatpush1.xpose.msra.mxu0 %v739
        %1194 = vmatprep.subr.mxu0 %v748
        %1195 = vmatpush1.xpose.msra.mxu0 %v747
        %1196 = vmatprep.subr.mxu0 %v756
        %1197 = vmatpush1.xpose.msra.mxu0 %v755
        %1198 = vmatprep.subr.mxu0 %v764
        %1199 = vmatpush1.xpose.msra.mxu0 %v763
        %1200 = vmatprep.subr.mxu0 %v772
        %1201 = vmatpush1.xpose.msra.mxu0 %v771
        %1202 = vmatprep.subr.mxu0 %v780
        %1203 = vmatpush1.xpose.msra.mxu0 %v779
        %1204 = vmatprep.mubr.f32.mxu0 %v268
        %1205 = vmatmul.mubr.f32.gmra.mrb[0].mxu0 %v267
        %v1206 = vpop.f32.mrb[0].mxu0
        %v1207 = vadd.f32 %v1136, %v1206
        %v1208 = vpop.f32.mrb[0].mxu0
        %v1209 = vadd.f32 %v1138, %v1208
        %1210 = vdwg.mxu0
        %1211 = vmatprep.subr.mxu0 %v534
        %1212 = vmatpush1.xpose.msra.mxu0 %v533
        %1213 = vmatprep.subr.mxu0 %v542
        %1214 = vmatpush1.xpose.msra.mxu0 %v541
        %1215 = vmatprep.subr.mxu0 %v550
        %1216 = vmatpush1.xpose.msra.mxu0 %v549
        %1217 = vmatprep.subr.mxu0 %v558
        %1218 = vmatpush1.xpose.msra.mxu0 %v557
        %1219 = vmatprep.subr.mxu0 %v566
        %1220 = vmatpush1.xpose.msra.mxu0 %v565
        %1221 = vmatprep.subr.mxu0 %v574
        %1222 = vmatpush1.xpose.msra.mxu0 %v573
        %1223 = vmatprep.subr.mxu0 %v582
        %1224 = vmatpush1.xpose.msra.mxu0 %v581
        %1225 = vmatprep.subr.mxu0 %v590
        %1226 = vmatpush1.xpose.msra.mxu0 %v589
        %1227 = vmatprep.subr.mxu0 %v598
        %1228 = vmatpush1.xpose.msra.mxu0 %v597
        %1229 = vmatprep.subr.mxu0 %v606
        %1230 = vmatpush1.xpose.msra.mxu0 %v605
        %1231 = vmatprep.subr.mxu0 %v614
        %1232 = vmatpush1.xpose.msra.mxu0 %v613
        %1233 = vmatprep.subr.mxu0 %v622
        %1234 = vmatpush1.xpose.msra.mxu0 %v621
        %1235 = vmatprep.subr.mxu0 %v630
        %1236 = vmatpush1.xpose.msra.mxu0 %v629
        %1237 = vmatprep.subr.mxu0 %v638
        %1238 = vmatpush1.xpose.msra.mxu0 %v637
        %1239 = vmatprep.subr.mxu0 %v646
        %1240 = vmatpush1.xpose.msra.mxu0 %v645
        %1241 = vmatprep.subr.mxu0 %v654
        %1242 = vmatpush1.xpose.msra.mxu0 %v653
        %1243 = vmatprep.subr.mxu0 %v662
        %1244 = vmatpush1.xpose.msra.mxu0 %v661
        %1245 = vmatprep.subr.mxu0 %v670
        %1246 = vmatpush1.xpose.msra.mxu0 %v669
        %1247 = vmatprep.subr.mxu0 %v678
        %1248 = vmatpush1.xpose.msra.mxu0 %v677
        %1249 = vmatprep.subr.mxu0 %v686
        %1250 = vmatpush1.xpose.msra.mxu0 %v685
        %1251 = vmatprep.subr.mxu0 %v694
        %1252 = vmatpush1.xpose.msra.mxu0 %v693
        %1253 = vmatprep.subr.mxu0 %v702
        %1254 = vmatpush1.xpose.msra.mxu0 %v701
        %1255 = vmatprep.subr.mxu0 %v710
        %1256 = vmatpush1.xpose.msra.mxu0 %v709
        %1257 = vmatprep.subr.mxu0 %v718
        %1258 = vmatpush1.xpose.msra.mxu0 %v717
        %1259 = vmatprep.subr.mxu0 %v726
        %1260 = vmatpush1.xpose.msra.mxu0 %v725
        %1261 = vmatprep.subr.mxu0 %v734
        %1262 = vmatpush1.xpose.msra.mxu0 %v733
        %1263 = vmatprep.subr.mxu0 %v742
        %1264 = vmatpush1.xpose.msra.mxu0 %v741
        %1265 = vmatprep.subr.mxu0 %v750
        %1266 = vmatpush1.xpose.msra.mxu0 %v749
        %1267 = vmatprep.subr.mxu0 %v758
        %1268 = vmatpush1.xpose.msra.mxu0 %v757
        %1269 = vmatprep.subr.mxu0 %v766
        %1270 = vmatpush1.xpose.msra.mxu0 %v765
        %1271 = vmatprep.subr.mxu0 %v774
        %1272 = vmatpush1.xpose.msra.mxu0 %v773
        %1273 = vmatprep.subr.mxu0 %v782
        %1274 = vmatpush1.xpose.msra.mxu0 %v781
        %1275 = vmatprep.mubr.f32.mxu0 %v270
        %1276 = vmatmul.mubr.f32.gmra.mrb[0].mxu0 %v269
        %v1277 = vpop.f32.mrb[0].mxu0
        %v1278 = vadd.f32 %v1207, %v1277
        %v1279 = vpop.f32.mrb[0].mxu0
        %v1280 = vadd.f32 %v1209, %v1279
        %1281 = vdwg.mxu0
        %1282 = vmatprep.subr.mxu0 %v536
        %1283 = vmatpush1.xpose.msra.mxu0 %v535
        %1284 = vmatprep.subr.mxu0 %v544
        %1285 = vmatpush1.xpose.msra.mxu0 %v543
        %1286 = vmatprep.subr.mxu0 %v552
        %1287 = vmatpush1.xpose.msra.mxu0 %v551
        %1288 = vmatprep.subr.mxu0 %v560
        %1289 = vmatpush1.xpose.msra.mxu0 %v559
        %1290 = vmatprep.subr.mxu0 %v568
        %1291 = vmatpush1.xpose.msra.mxu0 %v567
        %1292 = vmatprep.subr.mxu0 %v576
        %1293 = vmatpush1.xpose.msra.mxu0 %v575
        %1294 = vmatprep.subr.mxu0 %v584
        %1295 = vmatpush1.xpose.msra.mxu0 %v583
        %1296 = vmatprep.subr.mxu0 %v592
        %1297 = vmatpush1.xpose.msra.mxu0 %v591
        %1298 = vmatprep.subr.mxu0 %v600
        %1299 = vmatpush1.xpose.msra.mxu0 %v599
        %1300 = vmatprep.subr.mxu0 %v608
        %1301 = vmatpush1.xpose.msra.mxu0 %v607
        %1302 = vmatprep.subr.mxu0 %v616
        %1303 = vmatpush1.xpose.msra.mxu0 %v615
        %1304 = vmatprep.subr.mxu0 %v624
        %1305 = vmatpush1.xpose.msra.mxu0 %v623
        %1306 = vmatprep.subr.mxu0 %v632
        %1307 = vmatpush1.xpose.msra.mxu0 %v631
        %1308 = vmatprep.subr.mxu0 %v640
        %1309 = vmatpush1.xpose.msra.mxu0 %v639
        %1310 = vmatprep.subr.mxu0 %v648
        %1311 = vmatpush1.xpose.msra.mxu0 %v647
        %1312 = vmatprep.subr.mxu0 %v656
        %1313 = vmatpush1.xpose.msra.mxu0 %v655
        %1314 = vmatprep.subr.mxu0 %v664
        %1315 = vmatpush1.xpose.msra.mxu0 %v663
        %1316 = vmatprep.subr.mxu0 %v672
        %1317 = vmatpush1.xpose.msra.mxu0 %v671
        %1318 = vmatprep.subr.mxu0 %v680
        %1319 = vmatpush1.xpose.msra.mxu0 %v679
        %1320 = vmatprep.subr.mxu0 %v688
        %1321 = vmatpush1.xpose.msra.mxu0 %v687
        %1322 = vmatprep.subr.mxu0 %v696
        %1323 = vmatpush1.xpose.msra.mxu0 %v695
        %1324 = vmatprep.subr.mxu0 %v704
        %1325 = vmatpush1.xpose.msra.mxu0 %v703
        %1326 = vmatprep.subr.mxu0 %v712
        %1327 = vmatpush1.xpose.msra.mxu0 %v711
        %1328 = vmatprep.subr.mxu0 %v720
        %1329 = vmatpush1.xpose.msra.mxu0 %v719
        %1330 = vmatprep.subr.mxu0 %v728
        %1331 = vmatpush1.xpose.msra.mxu0 %v727
        %1332 = vmatprep.subr.mxu0 %v736
        %1333 = vmatpush1.xpose.msra.mxu0 %v735
        %1334 = vmatprep.subr.mxu0 %v744
        %1335 = vmatpush1.xpose.msra.mxu0 %v743
        %1336 = vmatprep.subr.mxu0 %v752
        %1337 = vmatpush1.xpose.msra.mxu0 %v751
        %1338 = vmatprep.subr.mxu0 %v760
        %1339 = vmatpush1.xpose.msra.mxu0 %v759
        %1340 = vmatprep.subr.mxu0 %v768
        %1341 = vmatpush1.xpose.msra.mxu0 %v767
        %1342 = vmatprep.subr.mxu0 %v776
        %1343 = vmatpush1.xpose.msra.mxu0 %v775
        %1344 = vmatprep.subr.mxu0 %v784
        %1345 = vmatpush1.xpose.msra.mxu0 %v783
        %1346 = vmatprep.mubr.f32.mxu0 %v272
        %1347 = vmatmul.mubr.f32.gmra.mrb[0].mxu0 %v271
        %v1348 = vpop.f32.mrb[0].mxu0
        %v1349 = vadd.f32 %v1278, %v1348
        %v1350 = vpop.f32.mrb[0].mxu0
        %v1351 = vadd.f32 %v1280, %v1350
        %1352 = vdwg.mxu0
        %1353 = vst [vmem:[%s212] sm:$0xff] %v1065
        %1354 = vst [vmem:[%s212 + $0x8] sm:$0xff] %v1067
        %1355 = vst [vmem:[%s212 + $0x10] sm:$0xff] %v1349
        %1356 = vst [vmem:[%s212 + $0x18] sm:$0xff] %v1351
        %s1357 = sand.u32 %s95, 1
        %s1358 = scalar_lea.sflag [#allocation4], %s1357
        %s1359 = sand.u32 %s95, 1
        %s1360 = smul.addr %s1359, 32
        %s1361 = scalar_lea.vmem [#allocation8], %s1360
        // Predicated region
        $region45: #{tpu_custom_call.1} parent=31 // pred_check
          %p1362 = pneg %p105
        $region46: #{tpu_custom_call.1} parent=31 // pred_check_branch
          %1364 = sbr.rel (%p1362) target = $region48
        $region47: #{tpu_custom_call.1} parent=31 // pred_region
          %s1365 = smul.u32 4, %s19
          %s1367 = ssub.s32 512, 512
          %1368 = vsyncadd %s1358, %s1367
          %s1369 = smul.addr %s1365, 128
          %s1370 = scalar_lea.hbm %s3, %s1369
          %s1372 = sshll.u32 %s1361, 4
          %s1373 = int_to_ptr.vmem [resolvable:$true] %s1372
          %1375 = dma.vmem_to_hbm [thread:$0]  %s1373, 512, %s1370, %s1358
        $region48: #{tpu_custom_call.1} parent=31 // pred_fallthru
          _
      $region32: #{tpu_custom_call.1} parent=5 // pred_fallthru
        _
      %p1376 = scmp.le.s32.totalorder 2, %s14
      // Predicated region
      $region49: #{tpu_custom_call.1} parent=5 // pred_check
        %p1377 = pneg %p1376
      $region50: #{tpu_custom_call.1} parent=5 // pred_check_branch
        %1379 = sbr.rel (%p1377) target = $region52
      $region51: #{tpu_custom_call.1} parent=5 // pred_region
        %s1380 = ssub.s32 %s14, 2
        // Predicated region
        $region53: #{tpu_custom_call.1} parent=51 // pred_check
          %p1381 = pneg %p111
        $region54: #{tpu_custom_call.1} parent=51 // pred_check_branch
          %1383 = sbr.rel (%p1381) target = $region56
        $region55: #{tpu_custom_call.1} parent=51 // pred_region
          %s1384 = sand.u32 %s96, 1
          %s1385 = scalar_lea.sflag [#allocation4], %s1384
          %s1386 = sand.u32 %s96, 1
          %s1387 = smul.addr %s1386, 32
          %s1388 = scalar_lea.vmem [#allocation8], %s1387
          %1389 = dma.done %s1385, 512
        $region56: #{tpu_custom_call.1} parent=51 // pred_fallthru
          _
      $region52: #{tpu_custom_call.1} parent=5 // pred_fallthru
        _
    $region6: #{tpu_custom_call.1} parent=1 // loop_footer
      %s18 = sadd.s32 1, %s14
    $region7: #{tpu_custom_call.1} parent=1 // loop_footer_branch
      %13 = sbr.rel target = $region3
    $region8: #{tpu_custom_call.1} parent=1 // loop_exit
      _
    %1390 = vsyncpa [#allocation3], 1
    %s1391 = scalar_lea.sflag [#allocation3], 1
    %1392 = vsyncpa %s1391, 1
    %1393 = vsyncpa [#allocation6], 1
    %1394 = vsyncpa [#allocation4], 1
    %s1395 = scalar_lea.sflag [#allocation4], 1
    %1396 = vsyncpa %s1395, 1

</llo_original>
